<compile_context>
chip_gen: v7x
topology: tpu7x:2x2x1
jax: 0.10.0
libtpu: 0.0.40
codegen_flags: <defaults>
</compile_context>

<pallas_src>
import functools
import math

import jax
import jax.numpy as jnp
from jax.experimental import pallas as pl
from jax.experimental.pallas import tpu as pltpu

_BN_EPS = 1e-5
_NEG_SLOPE = 0.2


def _round_up(v, m):
    return ((v + m - 1) // m) * m


# -----------------------------------------------------------------------------
# Fused kernel: conv3x3(+folded BN1) -> LeakyReLU(0.2) -> conv3x3(+folded BN2)
# -----------------------------------------------------------------------------
def _lift_project_kernel(x_ref, w1_ref, b1_ref, w2_ref, b2_ref,
                         mask_l_ref, mask_r_ref, o_ref, pad_ref,
                         *, H, W, Cin, C1, Cout):
    HW = H * W
    P = W + 1                      # halo on each side of the flattened row axis
    L = HW + 2 * P
    R = pad_ref.shape[0]

    # Zero the halo strips once per step (interiors are overwritten before use).
    pad_ref[:, 0:P] = jnp.zeros((R, P), jnp.float32)
    pad_ref[:, P + HW:L] = jnp.zeros((R, P), jnp.float32)

    # Column-wrap validity masks over the flattened spatial axis (loaded once).
    mask_l = mask_l_ref[...]       # (1, HW): 0 where col == 0     (dx == 0 tap)
    mask_r = mask_r_ref[...]       # (1, HW): 0 where col == W - 1 (dx == 2 tap)

    def conv3x3(cin, w_ref, b_ref):
        # im2col: one MXU matmul with K = 9*cin (bf16 inputs, f32 accumulation).
        taps = []
        for dy in range(3):
            for dx in range(3):
                t = pad_ref[0:cin, dy * W + dx: dy * W + dx + HW]   # (cin, HW)
                if dx == 0:
                    t = t * mask_l
                elif dx == 2:
                    t = t * mask_r
                taps.append(t)
        col = jnp.concatenate(taps, axis=0).astype(jnp.bfloat16)    # (9*cin, HW)
        acc = jnp.dot(w_ref[...], col, preferred_element_type=jnp.float32)
        return acc + b_ref[...]                                     # (cout, HW)

    # conv1 (+ folded BN1) + LeakyReLU(0.2)
    pad_ref[0:Cin, P:P + HW] = x_ref[0]
    h = conv3x3(Cin, w1_ref, b1_ref)
    h = jnp.where(h > 0, h, _NEG_SLOPE * h)          # f32 elementwise (v5e-safe)

    # conv2 (+ folded BN2)
    pad_ref[0:C1, P:P + HW] = h
    y = conv3x3(C1, w2_ref, b2_ref)
    o_ref[0] = y.astype(o_ref.dtype)                 # lane-dense (Cout, HW) store


# -----------------------------------------------------------------------------
# Wrapper
# -----------------------------------------------------------------------------
def _fold_bn(w, b, bn):
    """Fold inference-mode BatchNorm into the preceding conv's weights/bias."""
    gamma, beta, mean, var = bn
    scale = gamma / jnp.sqrt(var + _BN_EPS)
    return w * scale[:, None, None, None], (b - mean) * scale + beta


def lift_project_forward(x_nchw, params):
    """LiftProjectBlock forward.  x_nchw: (N, Cin, H, W) f32 -> (N, Cout, H, W)."""
    N, Cin, H, W = x_nchw.shape
    HW = H * W

    w1, b1 = _fold_bn(*params["conv1"], params["bn1"])   # (C1, Cin, 3, 3), (C1,)
    w2, b2 = _fold_bn(*params["conv2"], params["bn2"])   # (Cout, C1, 3, 3), (Cout,)
    C1, Cout = w1.shape[0], w2.shape[0]

    # Pad channel counts to a sublane-friendly multiple of 8 (zero channels are
    # an exact no-op through conv / LeakyReLU / conv).  One-time, tiny copies.
    Cin_p, C1_p = _round_up(Cin, 8), _round_up(C1, 8)
    x_flat = jnp.pad(x_nchw.reshape(N, Cin, HW).astype(jnp.float32),
                     ((0, 0), (0, Cin_p - Cin), (0, 0)))
    w1 = jnp.pad(w1, ((0, C1_p - C1), (0, Cin_p - Cin), (0, 0), (0, 0)))
    b1 = jnp.pad(b1, (0, C1_p - C1))
    w2 = jnp.pad(w2, ((0, 0), (0, C1_p - C1), (0, 0), (0, 0)))

    # (Cout, Cin, 3, 3) -> (Cout, 3, 3, Cin) -> (Cout, 9*Cin); bf16 MXU inputs.
    w1k = jnp.transpose(w1, (0, 2, 3, 1)).reshape(C1_p, 9 * Cin_p).astype(jnp.bfloat16)
    w2k = jnp.transpose(w2, (0, 2, 3, 1)).reshape(Cout, 9 * C1_p).astype(jnp.bfloat16)
    b1k = b1.reshape(C1_p, 1).astype(jnp.float32)
    b2k = b2.reshape(Cout, 1).astype(jnp.float32)

    # 0/1 column-wrap masks over the flattened spatial axis (host-side, once).
    col = jnp.arange(HW, dtype=jnp.int32) % W
    mask_l = (col >= 1).astype(jnp.float32).reshape(1, HW)
    mask_r = (col <= W - 2).astype(jnp.float32).reshape(1, HW)

    kernel = functools.partial(_lift_project_kernel, H=H, W=W,
                               Cin=Cin_p, C1=C1_p, Cout=Cout)
    pad_rows = max(Cin_p, C1_p)

    out = pl.pallas_call(
        kernel,
        out_shape=jax.ShapeDtypeStruct((N, Cout, HW), jnp.float32),
        grid_spec=pltpu.PrefetchScalarGridSpec(
            num_scalar_prefetch=0,
            grid=(N,),
            in_specs=[
                pl.BlockSpec((1, Cin_p, HW), lambda n: (n, 0, 0)),     # x
                pl.BlockSpec((C1_p, 9 * Cin_p), lambda n: (0, 0)),     # w1 (bf16)
                pl.BlockSpec((C1_p, 1), lambda n: (0, 0)),             # b1
                pl.BlockSpec((Cout, 9 * C1_p), lambda n: (0, 0)),      # w2 (bf16)
                pl.BlockSpec((Cout, 1), lambda n: (0, 0)),             # b2
                pl.BlockSpec((1, HW), lambda n: (0, 0)),               # mask_l
                pl.BlockSpec((1, HW), lambda n: (0, 0)),               # mask_r
            ],
            out_specs=pl.BlockSpec((1, Cout, HW), lambda n: (n, 0, 0)),
            scratch_shapes=[
                pltpu.VMEM((pad_rows, HW + 2 * (W + 1)), jnp.float32),  # halo'd scratch
            ],
        ),
        compiler_params=pltpu.CompilerParams(
            dimension_semantics=("parallel",),       # v7x: keep both TCs busy
            vmem_limit_bytes=32 * 1024 * 1024),
    )(x_flat, w1k, b1k, w2k, b2k, mask_l, mask_r)

    return out.reshape(N, Cout, H, W)


# -----------------------------------------------------------------------------
# Deterministic parameter construction
# -----------------------------------------------------------------------------
def make_lift_project_params(key, in_channels, out_channels, latent_dim):
    ks = jax.random.split(key, 12)

    def conv(kw, kb, cout, cin):
        std = math.sqrt(2.0 / (cin * 9))
        return (std * jax.random.normal(kw, (cout, cin, 3, 3), jnp.float32),
                0.1 * jax.random.normal(kb, (cout,), jnp.float32))

    def bn(kg, kb, km, kv, c):
        return (1.0 + 0.2 * jax.random.normal(kg, (c,), jnp.float32),   # gamma
                0.1 * jax.random.normal(kb, (c,), jnp.float32),         # beta
                0.1 * jax.random.normal(km, (c,), jnp.float32),         # running mean
                0.5 + jax.random.uniform(kv, (c,), jnp.float32))        # running var

    return {
        "conv1": conv(ks[0], ks[1], latent_dim, in_channels),
        "bn1": bn(ks[2], ks[3], ks[4], ks[5], latent_dim),
        "conv2": conv(ks[6], ks[7], out_channels, latent_dim),
        "bn2": bn(ks[8], ks[9], ks[10], ks[11], out_channels),
    }


# -----------------------------------------------------------------------------
# Pure-JAX reference (f32, highest precision) for the correctness check
# -----------------------------------------------------------------------------
def _ref_conv3x3(x, w, b):
    y = jax.lax.conv_general_dilated(
        x, w, window_strides=(1, 1), padding="SAME",
        dimension_numbers=("NCHW", "OIHW", "NCHW"),
        precision=jax.lax.Precision.HIGHEST)
    return y + b[None, :, None, None]


def _ref_bn(x, bn):
    gamma, beta, mean, var = bn
    scale = (gamma / jnp.sqrt(var + _BN_EPS))[None, :, None, None]
    return (x - mean[None, :, None, None]) * scale + beta[None, :, None, None]


def lift_project_forward_ref(x, params):
    h = _ref_bn(_ref_conv3x3(x, *params["conv1"]), params["bn1"])
    h = jnp.where(h > 0, h, _NEG_SLOPE * h)
    return _ref_bn(_ref_conv3x3(h, *params["conv2"]), params["bn2"])


if __name__ == "__main__":
    # Small shapes consistent with the module: in_size == out_size == (16, 16).
    batch, in_channels, out_channels, latent_dim = 2, 4, 3, 64
    H = W = 16

    key = jax.random.PRNGKey(0)
    kx, kp = jax.random.split(key)
    x = jax.random.normal(kx, (batch, in_channels, H, W), jnp.float32)   # NCHW
    params = make_lift_project_params(kp, in_channels, out_channels, latent_dim)

    out = jax.block_until_ready(lift_project_forward(x, params))
    assert out.shape == (batch, out_channels, H, W)

    ref = jax.block_until_ready(lift_project_forward_ref(x, params))
    err_linf = float(jnp.max(jnp.abs(out - ref)))
    err_l2 = float(jnp.linalg.norm(out - ref) / (jnp.linalg.norm(ref) + 1e-12))
    # bf16 MXU inputs (f32 accumulation) vs full-f32 reference.
    assert err_l2 < 2e-2 and err_linf < 1.5e-1, (err_l2, err_linf)

    print("KERNEL_OK")
</pallas_src>

<mosaic_0001>
module attributes {stable_mosaic.version = 11 : i64} {
  func.func @_lift_project_kernel(%arg0: i32, %arg1: memref<1x8x256xf32, #tpu.memory_space<vmem>>, %arg2: memref<64x72xbf16, #tpu.memory_space<vmem>>, %arg3: memref<64x1xf32, #tpu.memory_space<vmem>>, %arg4: memref<3x576xbf16, #tpu.memory_space<vmem>>, %arg5: memref<3x1xf32, #tpu.memory_space<vmem>>, %arg6: memref<1x256xf32, #tpu.memory_space<vmem>>, %arg7: memref<1x256xf32, #tpu.memory_space<vmem>>, %arg8: memref<1x3x256xf32, #tpu.memory_space<vmem>>, %arg9: memref<64x290xf32, #tpu.memory_space<vmem>>) attributes {dimension_semantics = [#tpu.dimension_semantics<parallel>], iteration_bounds = array<i64: 2>, scalar_prefetch = 0 : i64, scratch_operands = 1 : i64, tpu.core_type = #tpu.core_type<tc>, window_params = [{transform_indices = @transform_0, window_bounds = array<i64: 1, 8, 256>}, {pipeline_mode = #tpu.pipeline_mode<synchronous>, transform_indices = @transform_1, window_bounds = array<i64: 64, 72>}, {pipeline_mode = #tpu.pipeline_mode<synchronous>, transform_indices = @transform_2, window_bounds = array<i64: 64, 1>}, {pipeline_mode = #tpu.pipeline_mode<synchronous>, transform_indices = @transform_3, window_bounds = array<i64: 3, 576>}, {pipeline_mode = #tpu.pipeline_mode<synchronous>, transform_indices = @transform_4, window_bounds = array<i64: 3, 1>}, {pipeline_mode = #tpu.pipeline_mode<synchronous>, transform_indices = @transform_5, window_bounds = array<i64: 1, 256>}, {pipeline_mode = #tpu.pipeline_mode<synchronous>, transform_indices = @transform_6, window_bounds = array<i64: 1, 256>}, {transform_indices = @transform_7, window_bounds = array<i64: 1, 3, 256>}]} {
    %cst = arith.constant 0.000000e+00 : f32
    %0 = vector.broadcast %cst : f32 to vector<64x17xf32>
    %c0 = arith.constant 0 : index
    %c0_0 = arith.constant 0 : index
    %1 = vector.load %arg9[%c0, %c0_0] : memref<64x290xf32, #tpu.memory_space<vmem>>, vector<64x17xf32>
    tpu.vector_store %arg9[%c0, %c0_0], %0 {strides = array<i32>} : memref<64x290xf32, #tpu.memory_space<vmem>>, vector<64x17xf32>,
    %cst_1 = arith.constant 0.000000e+00 : f32
    %2 = vector.broadcast %cst_1 : f32 to vector<64x17xf32>
    %c0_2 = arith.constant 0 : index
    %c273 = arith.constant 273 : index
    %3 = vector.load %arg9[%c0_2, %c273] : memref<64x290xf32, #tpu.memory_space<vmem>>, vector<64x17xf32>
    tpu.vector_store %arg9[%c0_2, %c273], %2 {strides = array<i32>} : memref<64x290xf32, #tpu.memory_space<vmem>>, vector<64x17xf32>,
    %c0_3 = arith.constant 0 : index
    %c0_4 = arith.constant 0 : index
    %4 = vector.load %arg6[%c0_3, %c0_4] : memref<1x256xf32, #tpu.memory_space<vmem>>, vector<1x256xf32>
    %c0_5 = arith.constant 0 : index
    %c0_6 = arith.constant 0 : index
    %5 = vector.load %arg7[%c0_5, %c0_6] : memref<1x256xf32, #tpu.memory_space<vmem>>, vector<1x256xf32>
    %c0_7 = arith.constant 0 : index
    %c0_8 = arith.constant 0 : index
    %c0_9 = arith.constant 0 : index
    %6 = vector.load %arg1[%c0_7, %c0_8, %c0_9] : memref<1x8x256xf32, #tpu.memory_space<vmem>>, vector<1x8x256xf32>
    %7 = vector.shape_cast %6 : vector<1x8x256xf32> to vector<8x256xf32>
    %c0_10 = arith.constant 0 : index
    %c17 = arith.constant 17 : index
    %8 = vector.load %arg9[%c0_10, %c17] : memref<64x290xf32, #tpu.memory_space<vmem>>, vector<8x256xf32>
    tpu.vector_store %arg9[%c0_10, %c17], %7 {strides = array<i32>} : memref<64x290xf32, #tpu.memory_space<vmem>>, vector<8x256xf32>,
    %c0_11 = arith.constant 0 : index
    %c0_12 = arith.constant 0 : index
    %9 = vector.load %arg9[%c0_11, %c0_12] : memref<64x290xf32, #tpu.memory_space<vmem>>, vector<8x256xf32>
    %10 = vector.broadcast %4 : vector<1x256xf32> to vector<8x256xf32>
    %11 = arith.mulf %9, %10 : vector<8x256xf32>
    %c0_13 = arith.constant 0 : index
    %c1 = arith.constant 1 : index
    %12 = vector.load %arg9[%c0_13, %c1] : memref<64x290xf32, #tpu.memory_space<vmem>>, vector<8x256xf32>
    %c0_14 = arith.constant 0 : index
    %c2 = arith.constant 2 : index
    %13 = vector.load %arg9[%c0_14, %c2] : memref<64x290xf32, #tpu.memory_space<vmem>>, vector<8x256xf32>
    %14 = vector.broadcast %5 : vector<1x256xf32> to vector<8x256xf32>
    %15 = arith.mulf %13, %14 : vector<8x256xf32>
    %c0_15 = arith.constant 0 : index
    %c16 = arith.constant 16 : index
    %16 = vector.load %arg9[%c0_15, %c16] : memref<64x290xf32, #tpu.memory_space<vmem>>, vector<8x256xf32>
    %17 = vector.broadcast %4 : vector<1x256xf32> to vector<8x256xf32>
    %18 = arith.mulf %16, %17 : vector<8x256xf32>
    %c0_16 = arith.constant 0 : index
    %c17_17 = arith.constant 17 : index
    %19 = vector.load %arg9[%c0_16, %c17_17] : memref<64x290xf32, #tpu.memory_space<vmem>>, vector<8x256xf32>
    %c0_18 = arith.constant 0 : index
    %c18 = arith.constant 18 : index
    %20 = vector.load %arg9[%c0_18, %c18] : memref<64x290xf32, #tpu.memory_space<vmem>>, vector<8x256xf32>
    %21 = vector.broadcast %5 : vector<1x256xf32> to vector<8x256xf32>
    %22 = arith.mulf %20, %21 : vector<8x256xf32>
    %c0_19 = arith.constant 0 : index
    %c32 = arith.constant 32 : index
    %23 = vector.load %arg9[%c0_19, %c32] : memref<64x290xf32, #tpu.memory_space<vmem>>, vector<8x256xf32>
    %24 = vector.broadcast %4 : vector<1x256xf32> to vector<8x256xf32>
    %25 = arith.mulf %23, %24 : vector<8x256xf32>
    %c0_20 = arith.constant 0 : index
    %c33 = arith.constant 33 : index
    %26 = vector.load %arg9[%c0_20, %c33] : memref<64x290xf32, #tpu.memory_space<vmem>>, vector<8x256xf32>
    %c0_21 = arith.constant 0 : index
    %c34 = arith.constant 34 : index
    %27 = vector.load %arg9[%c0_21, %c34] : memref<64x290xf32, #tpu.memory_space<vmem>>, vector<8x256xf32>
    %28 = vector.broadcast %5 : vector<1x256xf32> to vector<8x256xf32>
    %29 = arith.mulf %27, %28 : vector<8x256xf32>
    %30 = tpu.concatenate %11, %12, %15, %18, %19, %22, %25, %26, %29 in 0 : vector<8x256xf32>, vector<8x256xf32>, vector<8x256xf32>, vector<8x256xf32>, vector<8x256xf32>, vector<8x256xf32>, vector<8x256xf32>, vector<8x256xf32>, vector<8x256xf32> -> vector<72x256xf32>
    %31 = arith.truncf %30 : vector<72x256xf32> to vector<72x256xbf16>
    %c0_22 = arith.constant 0 : index
    %c0_23 = arith.constant 0 : index
    %32 = vector.load %arg2[%c0_22, %c0_23] : memref<64x72xbf16, #tpu.memory_space<vmem>>, vector<64x72xbf16>
    %cst_24 = arith.constant dense<0.000000e+00> : vector<64x256xf32>
    %33 = tpu.matmul %32, %31, %cst_24 {dimension_numbers = #tpu.dot_dimension_numbers<[1], [0], [0], [1], [0, 0, 1, 1], [], []>} : vector<64x72xbf16>, vector<72x256xbf16>, vector<64x256xf32> -> vector<64x256xf32>
    %c0_25 = arith.constant 0 : index
    %c0_26 = arith.constant 0 : index
    %34 = vector.load %arg3[%c0_25, %c0_26] : memref<64x1xf32, #tpu.memory_space<vmem>>, vector<64x1xf32>
    %35 = vector.broadcast %34 : vector<64x1xf32> to vector<64x256xf32>
    %36 = arith.addf %33, %35 : vector<64x256xf32>
    %cst_27 = arith.constant 0.000000e+00 : f32
    %37 = vector.broadcast %cst_27 : f32 to vector<64x256xf32>
    %38 = arith.cmpf ogt, %36, %37 : vector<64x256xf32>
    %cst_28 = arith.constant 2.000000e-01 : f32
    %39 = vector.broadcast %cst_28 : f32 to vector<64x256xf32>
    %40 = arith.mulf %39, %36 : vector<64x256xf32>
    %41 = arith.select %38, %36, %40 : vector<64x256xi1>, vector<64x256xf32>
    %c0_29 = arith.constant 0 : index
    %c17_30 = arith.constant 17 : index
    %42 = vector.load %arg9[%c0_29, %c17_30] : memref<64x290xf32, #tpu.memory_space<vmem>>, vector<64x256xf32>
    tpu.vector_store %arg9[%c0_29, %c17_30], %41 {strides = array<i32>} : memref<64x290xf32, #tpu.memory_space<vmem>>, vector<64x256xf32>,
    %c0_31 = arith.constant 0 : index
    %c0_32 = arith.constant 0 : index
    %43 = vector.load %arg9[%c0_31, %c0_32] : memref<64x290xf32, #tpu.memory_space<vmem>>, vector<64x256xf32>
    %44 = vector.broadcast %4 : vector<1x256xf32> to vector<64x256xf32>
    %45 = arith.mulf %43, %44 : vector<64x256xf32>
    %c0_33 = arith.constant 0 : index
    %c1_34 = arith.constant 1 : index
    %46 = vector.load %arg9[%c0_33, %c1_34] : memref<64x290xf32, #tpu.memory_space<vmem>>, vector<64x256xf32>
    %c0_35 = arith.constant 0 : index
    %c2_36 = arith.constant 2 : index
    %47 = vector.load %arg9[%c0_35, %c2_36] : memref<64x290xf32, #tpu.memory_space<vmem>>, vector<64x256xf32>
    %48 = vector.broadcast %5 : vector<1x256xf32> to vector<64x256xf32>
    %49 = arith.mulf %47, %48 : vector<64x256xf32>
    %c0_37 = arith.constant 0 : index
    %c16_38 = arith.constant 16 : index
    %50 = vector.load %arg9[%c0_37, %c16_38] : memref<64x290xf32, #tpu.memory_space<vmem>>, vector<64x256xf32>
    %51 = vector.broadcast %4 : vector<1x256xf32> to vector<64x256xf32>
    %52 = arith.mulf %50, %51 : vector<64x256xf32>
    %c0_39 = arith.constant 0 : index
    %c17_40 = arith.constant 17 : index
    %53 = vector.load %arg9[%c0_39, %c17_40] : memref<64x290xf32, #tpu.memory_space<vmem>>, vector<64x256xf32>
    %c0_41 = arith.constant 0 : index
    %c18_42 = arith.constant 18 : index
    %54 = vector.load %arg9[%c0_41, %c18_42] : memref<64x290xf32, #tpu.memory_space<vmem>>, vector<64x256xf32>
    %55 = vector.broadcast %5 : vector<1x256xf32> to vector<64x256xf32>
    %56 = arith.mulf %54, %55 : vector<64x256xf32>
    %c0_43 = arith.constant 0 : index
    %c32_44 = arith.constant 32 : index
    %57 = vector.load %arg9[%c0_43, %c32_44] : memref<64x290xf32, #tpu.memory_space<vmem>>, vector<64x256xf32>
    %58 = vector.broadcast %4 : vector<1x256xf32> to vector<64x256xf32>
    %59 = arith.mulf %57, %58 : vector<64x256xf32>
    %c0_45 = arith.constant 0 : index
    %c33_46 = arith.constant 33 : index
    %60 = vector.load %arg9[%c0_45, %c33_46] : memref<64x290xf32, #tpu.memory_space<vmem>>, vector<64x256xf32>
    %c0_47 = arith.constant 0 : index
    %c34_48 = arith.constant 34 : index
    %61 = vector.load %arg9[%c0_47, %c34_48] : memref<64x290xf32, #tpu.memory_space<vmem>>, vector<64x256xf32>
    %62 = vector.broadcast %5 : vector<1x256xf32> to vector<64x256xf32>
    %63 = arith.mulf %61, %62 : vector<64x256xf32>
    %64 = tpu.concatenate %45, %46, %49, %52, %53, %56, %59, %60, %63 in 0 : vector<64x256xf32>, vector<64x256xf32>, vector<64x256xf32>, vector<64x256xf32>, vector<64x256xf32>, vector<64x256xf32>, vector<64x256xf32>, vector<64x256xf32>, vector<64x256xf32> -> vector<576x256xf32>
    %65 = arith.truncf %64 : vector<576x256xf32> to vector<576x256xbf16>
    %c0_49 = arith.constant 0 : index
    %c0_50 = arith.constant 0 : index
    %66 = vector.load %arg4[%c0_49, %c0_50] : memref<3x576xbf16, #tpu.memory_space<vmem>>, vector<3x576xbf16>
    %cst_51 = arith.constant dense<0.000000e+00> : vector<3x256xf32>
    %67 = tpu.matmul %66, %65, %cst_51 {dimension_numbers = #tpu.dot_dimension_numbers<[1], [0], [0], [1], [0, 0, 1, 1], [], []>} : vector<3x576xbf16>, vector<576x256xbf16>, vector<3x256xf32> -> vector<3x256xf32>
    %c0_52 = arith.constant 0 : index
    %c0_53 = arith.constant 0 : index
    %68 = vector.load %arg5[%c0_52, %c0_53] : memref<3x1xf32, #tpu.memory_space<vmem>>, vector<3x1xf32>
    %69 = vector.broadcast %68 : vector<3x1xf32> to vector<3x256xf32>
    %70 = arith.addf %67, %69 : vector<3x256xf32>
    %c0_54 = arith.constant 0 : index
    %c0_55 = arith.constant 0 : index
    %c0_56 = arith.constant 0 : index
    %71 = vector.load %arg8[%c0_54, %c0_55, %c0_56] : memref<1x3x256xf32, #tpu.memory_space<vmem>>, vector<1x3x256xf32>
    %72 = vector.shape_cast %71 : vector<1x3x256xf32> to vector<3x256xf32>
    %73 = vector.shape_cast %70 : vector<3x256xf32> to vector<1x3x256xf32>
    tpu.vector_store %arg8[%c0_54, %c0_55, %c0_56], %73 {strides = array<i32>} : memref<1x3x256xf32, #tpu.memory_space<vmem>>, vector<1x3x256xf32>,
    return
  }
  func.func @transform_0(%arg0: i32) -> (i32, i32, i32) {
    %c0_i32 = arith.constant 0 : i32
    %c0_i32_0 = arith.constant 0 : i32
    %c0_i32_1 = arith.constant 0 : i32
    return %arg0, %c0_i32, %c0_i32_0 : i32, i32, i32
  }
  func.func @transform_1(%arg0: i32) -> (i32, i32) {
    %c0_i32 = arith.constant 0 : i32
    %c0_i32_0 = arith.constant 0 : i32
    %c0_i32_1 = arith.constant 0 : i32
    return %c0_i32, %c0_i32_0 : i32, i32
  }
  func.func @transform_2(%arg0: i32) -> (i32, i32) {
    %c0_i32 = arith.constant 0 : i32
    %c0_i32_0 = arith.constant 0 : i32
    %c0_i32_1 = arith.constant 0 : i32
    return %c0_i32, %c0_i32_0 : i32, i32
  }
  func.func @transform_3(%arg0: i32) -> (i32, i32) {
    %c0_i32 = arith.constant 0 : i32
    %c0_i32_0 = arith.constant 0 : i32
    %c0_i32_1 = arith.constant 0 : i32
    return %c0_i32, %c0_i32_0 : i32, i32
  }
  func.func @transform_4(%arg0: i32) -> (i32, i32) {
    %c0_i32 = arith.constant 0 : i32
    %c0_i32_0 = arith.constant 0 : i32
    %c0_i32_1 = arith.constant 0 : i32
    return %c0_i32, %c0_i32_0 : i32, i32
  }
  func.func @transform_5(%arg0: i32) -> (i32, i32) {
    %c0_i32 = arith.constant 0 : i32
    %c0_i32_0 = arith.constant 0 : i32
    %c0_i32_1 = arith.constant 0 : i32
    return %c0_i32, %c0_i32_0 : i32, i32
  }
  func.func @transform_6(%arg0: i32) -> (i32, i32) {
    %c0_i32 = arith.constant 0 : i32
    %c0_i32_0 = arith.constant 0 : i32
    %c0_i32_1 = arith.constant 0 : i32
    return %c0_i32, %c0_i32_0 : i32, i32
  }
  func.func @transform_7(%arg0: i32) -> (i32, i32, i32) {
    %c0_i32 = arith.constant 0 : i32
    %c0_i32_0 = arith.constant 0 : i32
    %c0_i32_1 = arith.constant 0 : i32
    return %arg0, %c0_i32, %c0_i32_0 : i32, i32, i32
  }
}

</mosaic_0001>

<llo_original>
// kernel: tpu_custom_call.1
$region0: #{tpu_custom_call.1}
  #allocation0 [shape = 'u32[]', space=smem, size = 0x4, offset = 0x4, fixed_abs, tag = 'smem constant byte address 0x4 - core index']
  #allocation1 [shape = 'u32[144,128]{1,0:T(1,128)}', space=vmem, size = 0x12000, scoped, tag = 'internal scratch']
  #allocation2 [shape = 'f32[64,290]{1,0:T(8,128)}', space=vmem, size = 0x18000, scoped, tag = 'scratch operand']
  %s0 = inlined_call_operand.vmem [shape: f32[2,8,256], index: 0, kind: input, shape index: {}]
  %s1 = inlined_call_operand.vmem [shape: bf16[64,72], index: 1, kind: input, shape index: {}]
  %s2 = inlined_call_operand.vmem [shape: f32[64,1], index: 2, kind: input, shape index: {}]
  %s3 = inlined_call_operand.vmem [shape: bf16[3,576], index: 3, kind: input, shape index: {}]
  %s4 = inlined_call_operand.vmem [shape: f32[3,1], index: 4, kind: input, shape index: {}]
  %s5 = inlined_call_operand.vmem [shape: f32[1,256], index: 5, kind: input, shape index: {}]
  %s6 = inlined_call_operand.vmem [shape: f32[1,256], index: 6, kind: input, shape index: {}]
  %s7 = inlined_call_operand.vmem [shape: f32[2,3,256], index: 7, kind: output, shape index: {}]
  %s8 = sld [smem:[#allocation0]]
  $region61: #{tpu_custom_call.1} parent=0
    _
  %s10 = ssub.s32 1, %s8
  %s11 = scalar_select 0, %s10, %s8
  loop: start=0, step=1, limit=4
  $region2: #{tpu_custom_call.1} parent=0 // loop_pre_header
    _
  $region3: #{tpu_custom_call.1} parent=0 // loop_header
    %s13 = sphi 0, %s17
    %p14 = scmp.ge.s32.totalorder %s13, 4
    %s23 = sphi 0, %s25
    %s26 = sphi 0, %s23
    %s27 = sphi 0, %s26
    %s43 = sphi 0, %s27
    %s47 = sphi 0, %s47
    %s49 = sphi 0, %s47
    %s50 = sphi 0, %s49
    %s64 = sphi 0, %s50
    %s68 = sphi 0, %s68
    %s70 = sphi 0, %s68
    %s71 = sphi 0, %s70
    %s85 = sphi 0, %s71
    %s89 = sphi 0, %s89
    %s91 = sphi 0, %s89
    %s92 = sphi 0, %s91
    %s106 = sphi 0, %s92
    %s110 = sphi 0, %s110
    %s112 = sphi 0, %s110
    %s113 = sphi 0, %s112
    %s127 = sphi 0, %s113
    %s131 = sphi 0, %s131
    %s133 = sphi 0, %s131
    %s134 = sphi 0, %s133
    %s148 = sphi 0, %s134
    %s152 = sphi 0, %s152
    %s154 = sphi 0, %s152
    %s155 = sphi 0, %s154
    %s169 = sphi 0, %s155
    %s175 = sphi 0, %s177
    %s178 = sphi 0, %s175
    %s179 = sphi 0, %s178
    %s195 = sphi 0, %s179
  $region4: #{tpu_custom_call.1} parent=0 // loop_header_branch
    %16 = sbr.rel (%p14) target = $region8
  $region5: #{tpu_custom_call.1} parent=0 // loop_body
    %s18 = ssub.s32 %s13, 1
    %s19 = ssub.s32 %s13, 2
    %s20 = sadd.s32 %s13, 1
    %s21 = ssub.s32 %s13, %s20
    %p22 = scmp.eq.s32.totalorder %s21, 0
    %s24 = sadd.s32 %s23, 1
    %s25 = scalar_select %p22, %s23, %s24
    %p28 = pneg %p22
    %p29 = scmp.eq.s32.totalorder %s13, 1
    %p30 = por %p28, %p29
    %p31 = scmp.ne.s32.totalorder %s23, %s26
    %p32 = scmp.eq.s32.totalorder %s13, 0
    %p33 = por %p31, %p32
    %p34 = scmp.ne.s32.totalorder %s23, %s26
    %p35 = scmp.eq.s32.totalorder %s18, 1
    %p36 = por %p34, %p35
    %p37 = scmp.ne.s32.totalorder %s26, %s27
    %p38 = scmp.eq.s32.totalorder %s18, 0
    %p39 = por %p37, %p38
    %p40 = scmp.ne.s32.totalorder %s26, %s27
    %p41 = scmp.eq.s32.totalorder %s19, 1
    %p42 = por %p40, %p41
    %p44 = scmp.ne.s32.totalorder %s27, %s43
    %p45 = scmp.eq.s32.totalorder %s19, 0
    %p46 = por %p44, %p45
    %s48 = sadd.s32 %s47, 1
    %p51 = scmp.eq.s32.totalorder %s13, 1
    %p52 = scmp.ne.s32.totalorder %s47, %s49
    %p53 = scmp.eq.s32.totalorder %s13, 0
    %p54 = por %p52, %p53
    %p55 = scmp.ne.s32.totalorder %s47, %s49
    %p56 = scmp.eq.s32.totalorder %s18, 1
    %p57 = por %p55, %p56
    %p58 = scmp.ne.s32.totalorder %s49, %s50
    %p59 = scmp.eq.s32.totalorder %s18, 0
    %p60 = por %p58, %p59
    %p61 = scmp.ne.s32.totalorder %s49, %s50
    %p62 = scmp.eq.s32.totalorder %s19, 1
    %p63 = por %p61, %p62
    %p65 = scmp.ne.s32.totalorder %s50, %s64
    %p66 = scmp.eq.s32.totalorder %s19, 0
    %p67 = por %p65, %p66
    %s69 = sadd.s32 %s68, 1
    %p72 = scmp.eq.s32.totalorder %s13, 1
    %p73 = scmp.ne.s32.totalorder %s68, %s70
    %p74 = scmp.eq.s32.totalorder %s13, 0
    %p75 = por %p73, %p74
    %p76 = scmp.ne.s32.totalorder %s68, %s70
    %p77 = scmp.eq.s32.totalorder %s18, 1
    %p78 = por %p76, %p77
    %p79 = scmp.ne.s32.totalorder %s70, %s71
    %p80 = scmp.eq.s32.totalorder %s18, 0
    %p81 = por %p79, %p80
    %p82 = scmp.ne.s32.totalorder %s70, %s71
    %p83 = scmp.eq.s32.totalorder %s19, 1
    %p84 = por %p82, %p83
    %p86 = scmp.ne.s32.totalorder %s71, %s85
    %p87 = scmp.eq.s32.totalorder %s19, 0
    %p88 = por %p86, %p87
    %s90 = sadd.s32 %s89, 1
    %p93 = scmp.eq.s32.totalorder %s13, 1
    %p94 = scmp.ne.s32.totalorder %s89, %s91
    %p95 = scmp.eq.s32.totalorder %s13, 0
    %p96 = por %p94, %p95
    %p97 = scmp.ne.s32.totalorder %s89, %s91
    %p98 = scmp.eq.s32.totalorder %s18, 1
    %p99 = por %p97, %p98
    %p100 = scmp.ne.s32.totalorder %s91, %s92
    %p101 = scmp.eq.s32.totalorder %s18, 0
    %p102 = por %p100, %p101
    %p103 = scmp.ne.s32.totalorder %s91, %s92
    %p104 = scmp.eq.s32.totalorder %s19, 1
    %p105 = por %p103, %p104
    %p107 = scmp.ne.s32.totalorder %s92, %s106
    %p108 = scmp.eq.s32.totalorder %s19, 0
    %p109 = por %p107, %p108
    %s111 = sadd.s32 %s110, 1
    %p114 = scmp.eq.s32.totalorder %s13, 1
    %p115 = scmp.ne.s32.totalorder %s110, %s112
    %p116 = scmp.eq.s32.totalorder %s13, 0
    %p117 = por %p115, %p116
    %p118 = scmp.ne.s32.totalorder %s110, %s112
    %p119 = scmp.eq.s32.totalorder %s18, 1
    %p120 = por %p118, %p119
    %p121 = scmp.ne.s32.totalorder %s112, %s113
    %p122 = scmp.eq.s32.totalorder %s18, 0
    %p123 = por %p121, %p122
    %p124 = scmp.ne.s32.totalorder %s112, %s113
    %p125 = scmp.eq.s32.totalorder %s19, 1
    %p126 = por %p124, %p125
    %p128 = scmp.ne.s32.totalorder %s113, %s127
    %p129 = scmp.eq.s32.totalorder %s19, 0
    %p130 = por %p128, %p129
    %s132 = sadd.s32 %s131, 1
    %p135 = scmp.eq.s32.totalorder %s13, 1
    %p136 = scmp.ne.s32.totalorder %s131, %s133
    %p137 = scmp.eq.s32.totalorder %s13, 0
    %p138 = por %p136, %p137
    %p139 = scmp.ne.s32.totalorder %s131, %s133
    %p140 = scmp.eq.s32.totalorder %s18, 1
    %p141 = por %p139, %p140
    %p142 = scmp.ne.s32.totalorder %s133, %s134
    %p143 = scmp.eq.s32.totalorder %s18, 0
    %p144 = por %p142, %p143
    %p145 = scmp.ne.s32.totalorder %s133, %s134
    %p146 = scmp.eq.s32.totalorder %s19, 1
    %p147 = por %p145, %p146
    %p149 = scmp.ne.s32.totalorder %s134, %s148
    %p150 = scmp.eq.s32.totalorder %s19, 0
    %p151 = por %p149, %p150
    %s153 = sadd.s32 %s152, 1
    %p156 = scmp.eq.s32.totalorder %s13, 1
    %p157 = scmp.ne.s32.totalorder %s152, %s154
    %p158 = scmp.eq.s32.totalorder %s13, 0
    %p159 = por %p157, %p158
    %p160 = scmp.ne.s32.totalorder %s152, %s154
    %p161 = scmp.eq.s32.totalorder %s18, 1
    %p162 = por %p160, %p161
    %p163 = scmp.ne.s32.totalorder %s154, %s155
    %p164 = scmp.eq.s32.totalorder %s18, 0
    %p165 = por %p163, %p164
    %p166 = scmp.ne.s32.totalorder %s154, %s155
    %p167 = scmp.eq.s32.totalorder %s19, 1
    %p168 = por %p166, %p167
    %p170 = scmp.ne.s32.totalorder %s155, %s169
    %p171 = scmp.eq.s32.totalorder %s19, 0
    %p172 = por %p170, %p171
    %s173 = ssub.s32 %s13, %s20
    %p174 = scmp.eq.s32.totalorder %s173, 0
    %s176 = sadd.s32 %s175, 1
    %s177 = scalar_select %p174, %s175, %s176
    %p180 = pneg %p174
    %p181 = scmp.eq.s32.totalorder %s13, 1
    %p182 = por %p180, %p181
    %p183 = scmp.ne.s32.totalorder %s175, %s178
    %p184 = scmp.eq.s32.totalorder %s13, 0
    %p185 = por %p183, %p184
    %p186 = scmp.ne.s32.totalorder %s175, %s178
    %p187 = scmp.eq.s32.totalorder %s18, 1
    %p188 = por %p186, %p187
    %p189 = scmp.ne.s32.totalorder %s178, %s179
    %p190 = scmp.eq.s32.totalorder %s18, 0
    %p191 = por %p189, %p190
    %p192 = scmp.ne.s32.totalorder %s178, %s179
    %p193 = scmp.eq.s32.totalorder %s19, 1
    %p194 = por %p192, %p193
    %p196 = scmp.ne.s32.totalorder %s179, %s195
    %p197 = scmp.eq.s32.totalorder %s19, 0
    %p198 = por %p196, %p197
    %p199 = scmp.le.s32.totalorder 1, %s13
    %p200 = scmp.lt.s32.totalorder %s13, 3
    %p201 = pnand %p199, %p200
    %p202 = pneg %p201
    // Predicated region
    $region9: #{tpu_custom_call.1} parent=5 // pred_check
      _
    $region10: #{tpu_custom_call.1} parent=5 // pred_check_branch
      %204 = sbr.rel (%p201) target = $region12
    $region11: #{tpu_custom_call.1} parent=5 // pred_region
      %s205 = ssub.s32 %s13, 1
      // Predicated region
      $region13: #{tpu_custom_call.1} parent=11 // pred_check
        %p206 = pneg %p60
      $region14: #{tpu_custom_call.1} parent=11 // pred_check_branch
        %208 = sbr.rel (%p206) target = $region16
      $region15: #{tpu_custom_call.1} parent=11 // pred_region
        _
      $region16: #{tpu_custom_call.1} parent=11 // pred_fallthru
        _
      // Predicated region
      $region17: #{tpu_custom_call.1} parent=11 // pred_check
        %p209 = pneg %p81
      $region18: #{tpu_custom_call.1} parent=11 // pred_check_branch
        %211 = sbr.rel (%p209) target = $region20
      $region19: #{tpu_custom_call.1} parent=11 // pred_region
        _
      $region20: #{tpu_custom_call.1} parent=11 // pred_fallthru
        _
      // Predicated region
      $region21: #{tpu_custom_call.1} parent=11 // pred_check
        %p212 = pneg %p102
      $region22: #{tpu_custom_call.1} parent=11 // pred_check_branch
        %214 = sbr.rel (%p212) target = $region24
      $region23: #{tpu_custom_call.1} parent=11 // pred_region
        _
      $region24: #{tpu_custom_call.1} parent=11 // pred_fallthru
        _
      // Predicated region
      $region25: #{tpu_custom_call.1} parent=11 // pred_check
        %p215 = pneg %p123
      $region26: #{tpu_custom_call.1} parent=11 // pred_check_branch
        %217 = sbr.rel (%p215) target = $region28
      $region27: #{tpu_custom_call.1} parent=11 // pred_region
        _
      $region28: #{tpu_custom_call.1} parent=11 // pred_fallthru
        _
      // Predicated region
      $region29: #{tpu_custom_call.1} parent=11 // pred_check
        %p218 = pneg %p144
      $region30: #{tpu_custom_call.1} parent=11 // pred_check_branch
        %220 = sbr.rel (%p218) target = $region32
      $region31: #{tpu_custom_call.1} parent=11 // pred_region
        _
      $region32: #{tpu_custom_call.1} parent=11 // pred_fallthru
        _
      // Predicated region
      $region33: #{tpu_custom_call.1} parent=11 // pred_check
        %p221 = pneg %p165
      $region34: #{tpu_custom_call.1} parent=11 // pred_check_branch
        %223 = sbr.rel (%p221) target = $region36
      $region35: #{tpu_custom_call.1} parent=11 // pred_region
        _
      $region36: #{tpu_custom_call.1} parent=11 // pred_fallthru
        _
    $region12: #{tpu_custom_call.1} parent=5 // pred_fallthru
      _
    %p224 = scmp.lt.s32.totalorder %s13, 2
    // Predicated region
    $region37: #{tpu_custom_call.1} parent=5 // pred_check
      %p225 = pneg %p224
    $region38: #{tpu_custom_call.1} parent=5 // pred_check_branch
      %227 = sbr.rel (%p225) target = $region40
    $region39: #{tpu_custom_call.1} parent=5 // pred_region
      // Predicated region
      $region41: #{tpu_custom_call.1} parent=39 // pred_check
        %p228 = pneg %p33
      $region42: #{tpu_custom_call.1} parent=39 // pred_check_branch
        %230 = sbr.rel (%p228) target = $region44
      $region43: #{tpu_custom_call.1} parent=39 // pred_region
        %p231 = scmp.lt.s32.totalorder %s13, 1
        %s232 = scalar_select %p231, %s13, 1
        %s233 = smul.addr %s232, 2
        %s234 = smul.addr %s233, 8
        %s235 = scalar_lea.vmem %s0, %s234
      $region44: #{tpu_custom_call.1} parent=39 // pred_fallthru
        _
    $region40: #{tpu_custom_call.1} parent=5 // pred_fallthru
      _
    %p236 = scmp.le.s32.totalorder 1, %s13
    %p237 = scmp.lt.s32.totalorder %s13, 3
    %p238 = pnand %p236, %p237
    %p239 = pneg %p238
    // Predicated region
    $region45: #{tpu_custom_call.1} parent=5 // pred_check
      _
    $region46: #{tpu_custom_call.1} parent=5 // pred_check_branch
      %241 = sbr.rel (%p238) target = $region48
    $region47: #{tpu_custom_call.1} parent=5 // pred_region
      %s242 = ssub.s32 %s13, 1
      %p243 = scmp.lt.s32.totalorder %s18, 1
      %s244 = scalar_select %p243, %s18, 1
      %s245 = smul.addr %s244, 2
      %s246 = smul.addr %s245, 8
      %s247 = scalar_lea.vmem %s0, %s246
      %p248 = pneg %p39
      %p249 = pneg %p36
      %p250 = pneg %p60
      %p251 = pneg %p57
      %p252 = pneg %p81
      %p253 = pneg %p78
      %p254 = pneg %p102
      %p255 = pneg %p99
      %p256 = pneg %p123
      %p257 = pneg %p120
      %p258 = pneg %p144
      %p259 = pneg %p141
      %p260 = pneg %p165
      %p261 = pneg %p162
      %p262 = pneg %p191
      %p263 = pneg %p188
      %p264 = scmp.lt.s32.totalorder %s18, 1
      %s265 = scalar_select %p264, %s18, 1
      %s266 = smul.addr %s265, 2
      %s267 = smul.addr %s266, 4
      %s268 = scalar_lea.vmem %s7, %s267
      %p269 = scmp.lt.s32.totalorder %s18, 1
      %s270 = scalar_select %p269, %s18, 1
      %s271 = smul.addr %s270, 2
      %s272 = smul.addr %s271, 8
      %s273 = scalar_lea.vmem %s0, %s272
      %p274 = scmp.lt.s32.totalorder %s18, 1
      %s275 = scalar_select %p274, %s18, 1
      %s276 = smul.addr %s275, 2
      %s277 = smul.addr %s276, 4
      %s278 = scalar_lea.vmem %s7, %s277
      %vm280 = vcmask 138240
      %281 = vst.msk [vmem:[#allocation2] sm:$0xff] %vm280, 0.0
      %282 = vst.msk [vmem:[#allocation2 + $0x18] sm:$0xff] %vm280, 0.0
      %283 = vst.msk [vmem:[#allocation2 + $0x30] sm:$0xff] %vm280, 0.0
      %284 = vst.msk [vmem:[#allocation2 + $0x48] sm:$0xff] %vm280, 0.0
      %285 = vst.msk [vmem:[#allocation2 + $0x60] sm:$0xff] %vm280, 0.0
      %286 = vst.msk [vmem:[#allocation2 + $0x78] sm:$0xff] %vm280, 0.0
      %287 = vst.msk [vmem:[#allocation2 + $0x90] sm:$0xff] %vm280, 0.0
      %288 = vst.msk [vmem:[#allocation2 + $0xa8] sm:$0xff] %vm280, 0.0
      %vm289 = vcmask 277640
      %290 = vst.msk [vmem:[#allocation2 + $0x10] sm:$0xff] %vm289, 0.0
      %291 = vst.msk [vmem:[#allocation2 + $0x28] sm:$0xff] %vm289, 0.0
      %292 = vst.msk [vmem:[#allocation2 + $0x40] sm:$0xff] %vm289, 0.0
      %293 = vst.msk [vmem:[#allocation2 + $0x58] sm:$0xff] %vm289, 0.0
      %294 = vst.msk [vmem:[#allocation2 + $0x70] sm:$0xff] %vm289, 0.0
      %295 = vst.msk [vmem:[#allocation2 + $0x88] sm:$0xff] %vm289, 0.0
      %296 = vst.msk [vmem:[#allocation2 + $0xa0] sm:$0xff] %vm289, 0.0
      %297 = vst.msk [vmem:[#allocation2 + $0xb8] sm:$0xff] %vm289, 0.0
      %v298 = vld [vmem:[%s5] sm:$0x3]
      %v299 = vld [vmem:[%s6] sm:$0x3]
      %v300 = vld [vmem:[%s273] sm:$0xff]
      %v301 = vld [vmem:[%s273 + $0x8] sm:$0xff]
      %304 = vrot.lane.b32.xlu0 %v300, 17
      %v305 = vpop.permute.xlu0 %304
      %306 = vrot.lane.b32.xlu0 %v301, 17
      %v307 = vpop.permute.xlu0 %306
      %v308 = vsel %vm280, %v305, %v307
      %vm312 = vcmask 1047688
      %313 = vst.msk [vmem:[#allocation2] sm:$0xff] %vm312, %v305
      %314 = vst [vmem:[#allocation2 + $0x8] sm:$0xff] %v308
      %315 = vst.msk [vmem:[#allocation2 + $0x10] sm:$0xff] %vm280, %v307
      %v316 = vld [vmem:[#allocation2] sm:$0xff]
      %v317 = vld [vmem:[#allocation2 + $0x8] sm:$0xff]
      %v319 = vlaneseq
      %v320 = vshrl.u32 %v319, 7
      %v321 = vsub.s32 0, %v320
      %v322 = vrot.slane %v298, %v321
      %v323 = vlaneseq
      %v324 = vshrl.u32 %v323, 7
      %v325 = vsub.s32 1, %v324
      %v326 = vrot.slane %v298, %v325
      %v329 = vmul.f32 %v316, %v322
      %v330 = vmul.f32 %v317, %v326
      %v331 = vld [vmem:[#allocation2 + $0x10] sm:$0xff]
      %v333 = vlaneseq
      %v334 = vshrl.u32 %v333, 7
      %v335 = vsub.s32 0, %v334
      %v336 = vrot.slane %v299, %v335
      %v337 = vlaneseq
      %v338 = vshrl.u32 %v337, 7
      %v339 = vsub.s32 1, %v338
      %v340 = vrot.slane %v299, %v339
      %341 = vrot.lane.b32.xlu0 %v336, 2
      %v342 = vpop.permute.xlu0 %341
      %343 = vrot.lane.b32.xlu0 %v340, 2
      %v344 = vpop.permute.xlu0 %343
      %vm345 = vcmask 15360
      %v346 = vsel %vm345, %v342, %v344
      %v350 = vmul.f32 %v316, %v342
      %v351 = vmul.f32 %v317, %v346
      %v352 = vmul.f32 %v331, %v344
      %353 = vrot.lane.b32.xlu0 %v322, 16
      %v354 = vpop.permute.xlu0 %353
      %355 = vrot.lane.b32.xlu0 %v326, 16
      %v356 = vpop.permute.xlu0 %355
      %vm357 = vcmask 130048
      %v358 = vsel %vm357, %v354, %v356
      %v362 = vmul.f32 %v316, %v354
      %v363 = vmul.f32 %v317, %v358
      %v364 = vmul.f32 %v331, %v356
      %365 = vrot.lane.b32.xlu0 %v336, 18
      %v366 = vpop.permute.xlu0 %365
      %367 = vrot.lane.b32.xlu0 %v340, 18
      %v368 = vpop.permute.xlu0 %367
      %vm369 = vcmask 146432
      %v370 = vsel %vm369, %v366, %v368
      %v374 = vmul.f32 %v316, %v366
      %v375 = vmul.f32 %v317, %v370
      %v376 = vmul.f32 %v331, %v368
      %377 = vrot.lane.b32.xlu0 %v322, 32
      %v378 = vpop.permute.xlu0 %377
      %379 = vrot.lane.b32.xlu0 %v326, 32
      %v380 = vpop.permute.xlu0 %379
      %vm381 = vcmask 261120
      %v382 = vsel %vm381, %v378, %v380
      %v386 = vmul.f32 %v316, %v378
      %v387 = vmul.f32 %v317, %v382
      %v388 = vmul.f32 %v331, %v380
      %389 = vrot.lane.b32.xlu0 %v336, 34
      %v390 = vpop.permute.xlu0 %389
      %391 = vrot.lane.b32.xlu0 %v340, 34
      %v392 = vpop.permute.xlu0 %391
      %vm393 = vcmask 277504
      %v394 = vsel %vm393, %v390, %v392
      %v398 = vmul.f32 %v316, %v390
      %v399 = vmul.f32 %v317, %v394
      %v400 = vmul.f32 %v331, %v392
      %404 = vrot.lane.b32.xlu0 %v316, 127
      %v405 = vpop.permute.xlu0 %404
      %406 = vrot.lane.b32.xlu0 %v317, 127
      %v407 = vpop.permute.xlu0 %406
      %408 = vrot.lane.b32.xlu0 %v331, 127
      %v409 = vpop.permute.xlu0 %408
      %vm410 = vcmask 1039360
      %v411 = vsel %vm410, %v405, %v407
      %v412 = vsel %vm410, %v407, %v409
      %418 = vrot.lane.b32.xlu0 %v350, 126
      %v419 = vpop.permute.xlu0 %418
      %420 = vrot.lane.b32.xlu0 %v351, 126
      %v421 = vpop.permute.xlu0 %420
      %422 = vrot.lane.b32.xlu0 %v352, 126
      %v423 = vpop.permute.xlu0 %422
      %vm424 = vcmask 1031168
      %v425 = vsel %vm424, %v419, %v421
      %v426 = vsel %vm424, %v421, %v423
      %432 = vrot.lane.b32.xlu0 %v362, 112
      %v433 = vpop.permute.xlu0 %432
      %434 = vrot.lane.b32.xlu0 %v363, 112
      %v435 = vpop.permute.xlu0 %434
      %436 = vrot.lane.b32.xlu0 %v364, 112
      %v437 = vpop.permute.xlu0 %436
      %vm438 = vcmask 916480
      %v439 = vsel %vm438, %v433, %v435
      %v440 = vsel %vm438, %v435, %v437
      %443 = vrot.lane.b32.xlu0 %v316, 111
      %v444 = vpop.permute.xlu0 %443
      %445 = vrot.lane.b32.xlu0 %v317, 111
      %v446 = vpop.permute.xlu0 %445
      %447 = vrot.lane.b32.xlu0 %v331, 111
      %v448 = vpop.permute.xlu0 %447
      %vm449 = vcmask 908288
      %v450 = vsel %vm449, %v444, %v446
      %v451 = vsel %vm449, %v446, %v448
      %457 = vrot.lane.b32.xlu0 %v374, 110
      %v458 = vpop.permute.xlu0 %457
      %459 = vrot.lane.b32.xlu0 %v375, 110
      %v460 = vpop.permute.xlu0 %459
      %461 = vrot.lane.b32.xlu0 %v376, 110
      %v462 = vpop.permute.xlu0 %461
      %vm463 = vcmask 900096
      %v464 = vsel %vm463, %v458, %v460
      %v465 = vsel %vm463, %v460, %v462
      %471 = vrot.lane.b32.xlu0 %v386, 96
      %v472 = vpop.permute.xlu0 %471
      %473 = vrot.lane.b32.xlu0 %v387, 96
      %v474 = vpop.permute.xlu0 %473
      %475 = vrot.lane.b32.xlu0 %v388, 96
      %v476 = vpop.permute.xlu0 %475
      %vm477 = vcmask 785408
      %v478 = vsel %vm477, %v472, %v474
      %v479 = vsel %vm477, %v474, %v476
      %482 = vrot.lane.b32.xlu0 %v316, 95
      %v483 = vpop.permute.xlu0 %482
      %484 = vrot.lane.b32.xlu0 %v317, 95
      %v485 = vpop.permute.xlu0 %484
      %486 = vrot.lane.b32.xlu0 %v331, 95
      %v487 = vpop.permute.xlu0 %486
      %vm488 = vcmask 777216
      %v489 = vsel %vm488, %v483, %v485
      %v490 = vsel %vm488, %v485, %v487
      %496 = vrot.lane.b32.xlu0 %v398, 94
      %v497 = vpop.permute.xlu0 %496
      %498 = vrot.lane.b32.xlu0 %v399, 94
      %v499 = vpop.permute.xlu0 %498
      %500 = vrot.lane.b32.xlu0 %v400, 94
      %v501 = vpop.permute.xlu0 %500
      %vm502 = vcmask 769024
      %v503 = vsel %vm502, %v497, %v499
      %v504 = vsel %vm502, %v499, %v501
      %v507 = vpack.c.bf16 %v411, %v329
      %v508 = vpack.c.bf16 %v412, %v330
      %v509 = vpack.c.bf16 %v439, %v425
      %v510 = vpack.c.bf16 %v440, %v426
      %v511 = vpack.c.bf16 %v464, %v450
      %v512 = vpack.c.bf16 %v465, %v451
      %v513 = vpack.c.bf16 %v489, %v478
      %v514 = vpack.c.bf16 %v490, %v479
      %v515 = vpack.c.bf16 %v503, %v503
      %v516 = vpack.c.bf16 %v504, %v504
      %v517 = vld [vmem:[%s1] sm:$0xf]
      %v518 = vld [vmem:[%s1 + $0x4] sm:$0xf]
      %v519 = vld [vmem:[%s1 + $0x8] sm:$0xf]
      %v520 = vld [vmem:[%s1 + $0xc] sm:$0xf]
      %v521 = vld [vmem:[%s1 + $0x10] sm:$0xf]
      %v522 = vld [vmem:[%s1 + $0x14] sm:$0xf]
      %v523 = vld [vmem:[%s1 + $0x18] sm:$0xf]
      %v524 = vld [vmem:[%s1 + $0x1c] sm:$0xf]
      %v525 = vld [vmem:[%s2] sm:$0xff]
      %v526 = vld [vmem:[%s2 + $0x8] sm:$0xff]
      %v527 = vld [vmem:[%s2 + $0x10] sm:$0xff]
      %v528 = vld [vmem:[%s2 + $0x18] sm:$0xff]
      %v529 = vld [vmem:[%s2 + $0x20] sm:$0xff]
      %v530 = vld [vmem:[%s2 + $0x28] sm:$0xff]
      %v531 = vld [vmem:[%s2 + $0x30] sm:$0xff]
      %v532 = vld [vmem:[%s2 + $0x38] sm:$0xff]
      %534 = vset.pattern.permute.xlu0 0
      %535 = vperm.xlu0 %534, %v525
      %v536 = vpop.permute.xlu0 %535
      %539 = vset.pattern.permute.xlu0 0
      %540 = vperm.xlu0 %539, %v526
      %v541 = vpop.permute.xlu0 %540
      %544 = vset.pattern.permute.xlu0 0
      %545 = vperm.xlu0 %544, %v527
      %v546 = vpop.permute.xlu0 %545
      %549 = vset.pattern.permute.xlu0 0
      %550 = vperm.xlu0 %549, %v528
      %v551 = vpop.permute.xlu0 %550
      %554 = vset.pattern.permute.xlu0 0
      %555 = vperm.xlu0 %554, %v529
      %v556 = vpop.permute.xlu0 %555
      %559 = vset.pattern.permute.xlu0 0
      %560 = vperm.xlu0 %559, %v530
      %v561 = vpop.permute.xlu0 %560
      %564 = vset.pattern.permute.xlu0 0
      %565 = vperm.xlu0 %564, %v531
      %v566 = vpop.permute.xlu0 %565
      %569 = vset.pattern.permute.xlu0 0
      %570 = vperm.xlu0 %569, %v532
      %v571 = vpop.permute.xlu0 %570
      %v581 = vunpack.c.l.b16 %v517
      %v582 = vunpack.c.l.b16 %v518
      %v583 = vunpack.c.l.b16 %v519
      %v584 = vunpack.c.l.b16 %v520
      %v585 = vunpack.c.l.b16 %v521
      %v586 = vunpack.c.l.b16 %v522
      %v587 = vunpack.c.l.b16 %v523
      %v588 = vunpack.c.l.b16 %v524
      %v589 = vpack.c.b16 %v582, %v581
      %v590 = vpack.c.b16 %v584, %v583
      %v591 = vpack.c.b16 %v586, %v585
      %v592 = vpack.c.b16 %v588, %v587
      %vm593 = vcmask 588800
      %v595 = vsel %vm593, %v589, 0
      %v598 = vsel %vm593, %v590, 0
      %v601 = vsel %vm593, %v591, 0
      %v604 = vsel %vm593, %v592, 0
      %vm606 = vcmask 1043456
      %v608 = vsel %vm606, %v515, 0
      %v611 = vsel %vm606, %v516, 0
      %613 = vmatprep.subr.bf16.mxu0 %v508
      %614 = vmatpush1.bf16.msra.mxu0 %v507
      %615 = vmatprep.subr.bf16.mxu0 %v510
      %616 = vmatpush1.bf16.msra.mxu0 %v509
      %617 = vmatprep.subr.bf16.mxu0 %v512
      %618 = vmatpush1.bf16.msra.mxu0 %v511
      %619 = vmatprep.subr.bf16.mxu0 %v514
      %620 = vmatpush1.bf16.msra.mxu0 %v513
      %621 = vmatprep.subr.bf16.mxu0 %v611
      %622 = vmatpush1.bf16.msra.mxu0 %v608
      %623 = vmatprep.subr.bf16.mxu0 0
      %624 = vmatpush1.bf16.msra.mxu0 0
      %625 = vmatprep.subr.bf16.mxu0 0
      %626 = vmatpush1.bf16.msra.mxu0 0
      %627 = vmatprep.subr.bf16.mxu0 0
      %628 = vmatpush1.bf16.msra.mxu0 0
      %629 = vmatprep.subr.bf16.mxu0 0
      %630 = vmatpush1.bf16.msra.mxu0 0
      %631 = vmatprep.subr.bf16.mxu0 0
      %632 = vmatpush1.bf16.msra.mxu0 0
      %633 = vmatprep.subr.bf16.mxu0 0
      %634 = vmatpush1.bf16.msra.mxu0 0
      %635 = vmatprep.subr.bf16.mxu0 0
      %636 = vmatpush1.bf16.msra.mxu0 0
      %637 = vmatprep.subr.bf16.mxu0 0
      %638 = vmatpush1.bf16.msra.mxu0 0
      %639 = vmatprep.subr.bf16.mxu0 0
      %640 = vmatpush1.bf16.msra.mxu0 0
      %641 = vmatprep.subr.bf16.mxu0 0
      %642 = vmatpush1.bf16.msra.mxu0 0
      %643 = vmatprep.subr.bf16.mxu0 0
      %644 = vmatpush1.bf16.msra.mxu0 0
      %645 = vmatprep.mubr.bf16.mxu0 0
      %646 = vmatmul.mubr.bf16.gmra.mrb[0].mxu0 %v595
      %v647 = vpop.f32.mrb[0].mxu0
      %v648 = vadd.f32 %v536, %v647
      %v649 = vpop.f32.mrb[0].mxu0
      %v650 = vadd.f32 %v536, %v649
      %v651 = vpop.f32.mrb[0].mxu0
      %v652 = vadd.f32 %v541, %v651
      %v653 = vpop.f32.mrb[0].mxu0
      %v654 = vadd.f32 %v541, %v653
      %655 = vmatprep.mubr.bf16.mxu0 0
      %656 = vmatmul.mubr.bf16.gmra.mrb[0].mxu0 %v598
      %v657 = vpop.f32.mrb[0].mxu0
      %v658 = vadd.f32 %v546, %v657
      %v659 = vpop.f32.mrb[0].mxu0
      %v660 = vadd.f32 %v546, %v659
      %v661 = vpop.f32.mrb[0].mxu0
      %v662 = vadd.f32 %v551, %v661
      %v663 = vpop.f32.mrb[0].mxu0
      %v664 = vadd.f32 %v551, %v663
      %665 = vmatprep.mubr.bf16.mxu0 0
      %666 = vmatmul.mubr.bf16.gmra.mrb[0].mxu0 %v601
      %v667 = vpop.f32.mrb[0].mxu0
      %v668 = vadd.f32 %v556, %v667
      %v669 = vpop.f32.mrb[0].mxu0
      %v670 = vadd.f32 %v556, %v669
      %v671 = vpop.f32.mrb[0].mxu0
      %v672 = vadd.f32 %v561, %v671
      %v673 = vpop.f32.mrb[0].mxu0
      %v674 = vadd.f32 %v561, %v673
      %675 = vmatprep.mubr.bf16.mxu0 0
      %676 = vmatmul.mubr.bf16.gmra.mrb[0].mxu0 %v604
      %v677 = vpop.f32.mrb[0].mxu0
      %v678 = vadd.f32 %v566, %v677
      %v679 = vpop.f32.mrb[0].mxu0
      %v680 = vadd.f32 %v566, %v679
      %v681 = vpop.f32.mrb[0].mxu0
      %v682 = vadd.f32 %v571, %v681
      %v683 = vpop.f32.mrb[0].mxu0
      %v684 = vadd.f32 %v571, %v683
      %685 = vdwg.mxu0
      %vm686 = vcmp.gt.f32.partialorder %v648, 0.0
      %vm687 = vcmp.gt.f32.partialorder %v650, 0.0
      %vm688 = vcmp.gt.f32.partialorder %v652, 0.0
      %vm689 = vcmp.gt.f32.partialorder %v654, 0.0
      %vm690 = vcmp.gt.f32.partialorder %v658, 0.0
      %vm691 = vcmp.gt.f32.partialorder %v660, 0.0
      %vm692 = vcmp.gt.f32.partialorder %v662, 0.0
      %vm693 = vcmp.gt.f32.partialorder %v664, 0.0
      %vm694 = vcmp.gt.f32.partialorder %v668, 0.0
      %vm695 = vcmp.gt.f32.partialorder %v670, 0.0
      %vm696 = vcmp.gt.f32.partialorder %v672, 0.0
      %vm697 = vcmp.gt.f32.partialorder %v674, 0.0
      %vm698 = vcmp.gt.f32.partialorder %v678, 0.0
      %vm699 = vcmp.gt.f32.partialorder %v680, 0.0
      %vm700 = vcmp.gt.f32.partialorder %v682, 0.0
      %vm701 = vcmp.gt.f32.partialorder %v684, 0.0
      %v702 = vmul.f32 %v648, 0.2
      %v703 = vmul.f32 %v650, 0.2
      %v704 = vmul.f32 %v652, 0.2
      %v705 = vmul.f32 %v654, 0.2
      %v706 = vmul.f32 %v658, 0.2
      %v707 = vmul.f32 %v660, 0.2
      %v708 = vmul.f32 %v662, 0.2
      %v709 = vmul.f32 %v664, 0.2
      %v710 = vmul.f32 %v668, 0.2
      %v711 = vmul.f32 %v670, 0.2
      %v712 = vmul.f32 %v672, 0.2
      %v713 = vmul.f32 %v674, 0.2
      %v714 = vmul.f32 %v678, 0.2
      %v715 = vmul.f32 %v680, 0.2
      %v716 = vmul.f32 %v682, 0.2
      %v717 = vmul.f32 %v684, 0.2
      %v718 = vsel %vm686, %v648, %v702
      %v719 = vsel %vm687, %v650, %v703
      %v720 = vsel %vm688, %v652, %v704
      %v721 = vsel %vm689, %v654, %v705
      %v722 = vsel %vm690, %v658, %v706
      %v723 = vsel %vm691, %v660, %v707
      %v724 = vsel %vm692, %v662, %v708
      %v725 = vsel %vm693, %v664, %v709
      %v726 = vsel %vm694, %v668, %v710
      %v727 = vsel %vm695, %v670, %v711
      %v728 = vsel %vm696, %v672, %v712
      %v729 = vsel %vm697, %v674, %v713
      %v730 = vsel %vm698, %v678, %v714
      %v731 = vsel %vm699, %v680, %v715
      %v732 = vsel %vm700, %v682, %v716
      %v733 = vsel %vm701, %v684, %v717
      %750 = vrot.lane.b32.xlu0 %v718, 17
      %v751 = vpop.permute.xlu0 %750
      %752 = vrot.lane.b32.xlu0 %v719, 17
      %v753 = vpop.permute.xlu0 %752
      %754 = vrot.lane.b32.xlu0 %v720, 17
      %v755 = vpop.permute.xlu0 %754
      %756 = vrot.lane.b32.xlu0 %v721, 17
      %v757 = vpop.permute.xlu0 %756
      %758 = vrot.lane.b32.xlu0 %v722, 17
      %v759 = vpop.permute.xlu0 %758
      %760 = vrot.lane.b32.xlu0 %v723, 17
      %v761 = vpop.permute.xlu0 %760
      %762 = vrot.lane.b32.xlu0 %v724, 17
      %v763 = vpop.permute.xlu0 %762
      %764 = vrot.lane.b32.xlu0 %v725, 17
      %v765 = vpop.permute.xlu0 %764
      %766 = vrot.lane.b32.xlu0 %v726, 17
      %v767 = vpop.permute.xlu0 %766
      %768 = vrot.lane.b32.xlu0 %v727, 17
      %v769 = vpop.permute.xlu0 %768
      %770 = vrot.lane.b32.xlu0 %v728, 17
      %v771 = vpop.permute.xlu0 %770
      %772 = vrot.lane.b32.xlu0 %v729, 17
      %v773 = vpop.permute.xlu0 %772
      %774 = vrot.lane.b32.xlu0 %v730, 17
      %v775 = vpop.permute.xlu0 %774
      %776 = vrot.lane.b32.xlu0 %v731, 17
      %v777 = vpop.permute.xlu0 %776
      %778 = vrot.lane.b32.xlu0 %v732, 17
      %v779 = vpop.permute.xlu0 %778
      %780 = vrot.lane.b32.xlu0 %v733, 17
      %v781 = vpop.permute.xlu0 %780
      %v782 = vsel %vm280, %v751, %v753
      %v783 = vsel %vm280, %v755, %v757
      %v784 = vsel %vm280, %v759, %v761
      %v785 = vsel %vm280, %v763, %v765
      %v786 = vsel %vm280, %v767, %v769
      %v787 = vsel %vm280, %v771, %v773
      %v788 = vsel %vm280, %v775, %v777
      %v789 = vsel %vm280, %v779, %v781
      %814 = vst.msk [vmem:[#allocation2] sm:$0xff] %vm312, %v751
      %815 = vst [vmem:[#allocation2 + $0x8] sm:$0xff] %v782
      %816 = vst.msk [vmem:[#allocation2 + $0x10] sm:$0xff] %vm280, %v753
      %817 = vst.msk [vmem:[#allocation2 + $0x18] sm:$0xff] %vm312, %v755
      %818 = vst [vmem:[#allocation2 + $0x20] sm:$0xff] %v783
      %819 = vst.msk [vmem:[#allocation2 + $0x28] sm:$0xff] %vm280, %v757
      %820 = vst.msk [vmem:[#allocation2 + $0x30] sm:$0xff] %vm312, %v759
      %821 = vst [vmem:[#allocation2 + $0x38] sm:$0xff] %v784
      %822 = vst.msk [vmem:[#allocation2 + $0x40] sm:$0xff] %vm280, %v761
      %823 = vst.msk [vmem:[#allocation2 + $0x48] sm:$0xff] %vm312, %v763
      %824 = vst [vmem:[#allocation2 + $0x50] sm:$0xff] %v785
      %825 = vst.msk [vmem:[#allocation2 + $0x58] sm:$0xff] %vm280, %v765
      %826 = vst.msk [vmem:[#allocation2 + $0x60] sm:$0xff] %vm312, %v767
      %827 = vst [vmem:[#allocation2 + $0x68] sm:$0xff] %v786
      %828 = vst.msk [vmem:[#allocation2 + $0x70] sm:$0xff] %vm280, %v769
      %829 = vst.msk [vmem:[#allocation2 + $0x78] sm:$0xff] %vm312, %v771
      %830 = vst [vmem:[#allocation2 + $0x80] sm:$0xff] %v787
      %831 = vst.msk [vmem:[#allocation2 + $0x88] sm:$0xff] %vm280, %v773
      %832 = vst.msk [vmem:[#allocation2 + $0x90] sm:$0xff] %vm312, %v775
      %833 = vst [vmem:[#allocation2 + $0x98] sm:$0xff] %v788
      %834 = vst.msk [vmem:[#allocation2 + $0xa0] sm:$0xff] %vm280, %v777
      %835 = vst.msk [vmem:[#allocation2 + $0xa8] sm:$0xff] %vm312, %v779
      %836 = vst [vmem:[#allocation2 + $0xb0] sm:$0xff] %v789
      %837 = vst.msk [vmem:[#allocation2 + $0xb8] sm:$0xff] %vm280, %v781
      %v838 = vld [vmem:[#allocation2] sm:$0xff]
      %v839 = vld [vmem:[#allocation2 + $0x8] sm:$0xff]
      %v840 = vld [vmem:[#allocation2 + $0x18] sm:$0xff]
      %v841 = vld [vmem:[#allocation2 + $0x20] sm:$0xff]
      %v842 = vld [vmem:[#allocation2 + $0x30] sm:$0xff]
      %v843 = vld [vmem:[#allocation2 + $0x38] sm:$0xff]
      %v844 = vld [vmem:[#allocation2 + $0x48] sm:$0xff]
      %v845 = vld [vmem:[#allocation2 + $0x50] sm:$0xff]
      %v846 = vld [vmem:[#allocation2 + $0x60] sm:$0xff]
      %v847 = vld [vmem:[#allocation2 + $0x68] sm:$0xff]
      %v848 = vld [vmem:[#allocation2 + $0x78] sm:$0xff]
      %v849 = vld [vmem:[#allocation2 + $0x80] sm:$0xff]
      %v850 = vld [vmem:[#allocation2 + $0x90] sm:$0xff]
      %v851 = vld [vmem:[#allocation2 + $0x98] sm:$0xff]
      %v852 = vld [vmem:[#allocation2 + $0xa8] sm:$0xff]
      %v853 = vld [vmem:[#allocation2 + $0xb0] sm:$0xff]
      %v854 = vmul.f32 %v838, %v322
      %v855 = vmul.f32 %v839, %v326
      %v856 = vmul.f32 %v840, %v322
      %v857 = vmul.f32 %v841, %v326
      %v858 = vmul.f32 %v842, %v322
      %v859 = vmul.f32 %v843, %v326
      %v860 = vmul.f32 %v844, %v322
      %v861 = vmul.f32 %v845, %v326
      %v862 = vmul.f32 %v846, %v322
      %v863 = vmul.f32 %v847, %v326
      %v864 = vmul.f32 %v848, %v322
      %v865 = vmul.f32 %v849, %v326
      %v866 = vmul.f32 %v850, %v322
      %v867 = vmul.f32 %v851, %v326
      %v868 = vmul.f32 %v852, %v322
      %v869 = vmul.f32 %v853, %v326
      %v870 = vld [vmem:[#allocation2 + $0x10] sm:$0xff]
      %v871 = vld [vmem:[#allocation2 + $0x28] sm:$0xff]
      %v872 = vld [vmem:[#allocation2 + $0x40] sm:$0xff]
      %v873 = vld [vmem:[#allocation2 + $0x58] sm:$0xff]
      %v874 = vld [vmem:[#allocation2 + $0x70] sm:$0xff]
      %v875 = vld [vmem:[#allocation2 + $0x88] sm:$0xff]
      %v876 = vld [vmem:[#allocation2 + $0xa0] sm:$0xff]
      %v877 = vld [vmem:[#allocation2 + $0xb8] sm:$0xff]
      %v878 = vmul.f32 %v838, %v342
      %v879 = vmul.f32 %v839, %v346
      %v880 = vmul.f32 %v870, %v344
      %v881 = vmul.f32 %v840, %v342
      %v882 = vmul.f32 %v841, %v346
      %v883 = vmul.f32 %v871, %v344
      %v884 = vmul.f32 %v842, %v342
      %v885 = vmul.f32 %v843, %v346
      %v886 = vmul.f32 %v872, %v344
      %v887 = vmul.f32 %v844, %v342
      %v888 = vmul.f32 %v845, %v346
      %v889 = vmul.f32 %v873, %v344
      %v890 = vmul.f32 %v846, %v342
      %v891 = vmul.f32 %v847, %v346
      %v892 = vmul.f32 %v874, %v344
      %v893 = vmul.f32 %v848, %v342
      %v894 = vmul.f32 %v849, %v346
      %v895 = vmul.f32 %v875, %v344
      %v896 = vmul.f32 %v850, %v342
      %v897 = vmul.f32 %v851, %v346
      %v898 = vmul.f32 %v876, %v344
      %v899 = vmul.f32 %v852, %v342
      %v900 = vmul.f32 %v853, %v346
      %v901 = vmul.f32 %v877, %v344
      %v902 = vmul.f32 %v838, %v354
      %v903 = vmul.f32 %v839, %v358
      %v904 = vmul.f32 %v870, %v356
      %v905 = vmul.f32 %v840, %v354
      %v906 = vmul.f32 %v841, %v358
      %v907 = vmul.f32 %v871, %v356
      %v908 = vmul.f32 %v842, %v354
      %v909 = vmul.f32 %v843, %v358
      %v910 = vmul.f32 %v872, %v356
      %v911 = vmul.f32 %v844, %v354
      %v912 = vmul.f32 %v845, %v358
      %v913 = vmul.f32 %v873, %v356
      %v914 = vmul.f32 %v846, %v354
      %v915 = vmul.f32 %v847, %v358
      %v916 = vmul.f32 %v874, %v356
      %v917 = vmul.f32 %v848, %v354
      %v918 = vmul.f32 %v849, %v358
      %v919 = vmul.f32 %v875, %v356
      %v920 = vmul.f32 %v850, %v354
      %v921 = vmul.f32 %v851, %v358
      %v922 = vmul.f32 %v876, %v356
      %v923 = vmul.f32 %v852, %v354
      %v924 = vmul.f32 %v853, %v358
      %v925 = vmul.f32 %v877, %v356
      %v926 = vmul.f32 %v838, %v366
      %v927 = vmul.f32 %v839, %v370
      %v928 = vmul.f32 %v870, %v368
      %v929 = vmul.f32 %v840, %v366
      %v930 = vmul.f32 %v841, %v370
      %v931 = vmul.f32 %v871, %v368
      %v932 = vmul.f32 %v842, %v366
      %v933 = vmul.f32 %v843, %v370
      %v934 = vmul.f32 %v872, %v368
      %v935 = vmul.f32 %v844, %v366
      %v936 = vmul.f32 %v845, %v370
      %v937 = vmul.f32 %v873, %v368
      %v938 = vmul.f32 %v846, %v366
      %v939 = vmul.f32 %v847, %v370
      %v940 = vmul.f32 %v874, %v368
      %v941 = vmul.f32 %v848, %v366
      %v942 = vmul.f32 %v849, %v370
      %v943 = vmul.f32 %v875, %v368
      %v944 = vmul.f32 %v850, %v366
      %v945 = vmul.f32 %v851, %v370
      %v946 = vmul.f32 %v876, %v368
      %v947 = vmul.f32 %v852, %v366
      %v948 = vmul.f32 %v853, %v370
      %v949 = vmul.f32 %v877, %v368
      %v950 = vmul.f32 %v838, %v378
      %v951 = vmul.f32 %v839, %v382
      %v952 = vmul.f32 %v870, %v380
      %v953 = vmul.f32 %v840, %v378
      %v954 = vmul.f32 %v841, %v382
      %v955 = vmul.f32 %v871, %v380
      %v956 = vmul.f32 %v842, %v378
      %v957 = vmul.f32 %v843, %v382
      %v958 = vmul.f32 %v872, %v380
      %v959 = vmul.f32 %v844, %v378
      %v960 = vmul.f32 %v845, %v382
      %v961 = vmul.f32 %v873, %v380
      %v962 = vmul.f32 %v846, %v378
      %v963 = vmul.f32 %v847, %v382
      %v964 = vmul.f32 %v874, %v380
      %v965 = vmul.f32 %v848, %v378
      %v966 = vmul.f32 %v849, %v382
      %v967 = vmul.f32 %v875, %v380
      %v968 = vmul.f32 %v850, %v378
      %v969 = vmul.f32 %v851, %v382
      %v970 = vmul.f32 %v876, %v380
      %v971 = vmul.f32 %v852, %v378
      %v972 = vmul.f32 %v853, %v382
      %v973 = vmul.f32 %v877, %v380
      %v974 = vmul.f32 %v838, %v390
      %v975 = vmul.f32 %v839, %v394
      %v976 = vmul.f32 %v870, %v392
      %v977 = vmul.f32 %v840, %v390
      %v978 = vmul.f32 %v841, %v394
      %v979 = vmul.f32 %v871, %v392
      %v980 = vmul.f32 %v842, %v390
      %v981 = vmul.f32 %v843, %v394
      %v982 = vmul.f32 %v872, %v392
      %v983 = vmul.f32 %v844, %v390
      %v984 = vmul.f32 %v845, %v394
      %v985 = vmul.f32 %v873, %v392
      %v986 = vmul.f32 %v846, %v390
      %v987 = vmul.f32 %v847, %v394
      %v988 = vmul.f32 %v874, %v392
      %v989 = vmul.f32 %v848, %v390
      %v990 = vmul.f32 %v849, %v394
      %v991 = vmul.f32 %v875, %v392
      %v992 = vmul.f32 %v850, %v390
      %v993 = vmul.f32 %v851, %v394
      %v994 = vmul.f32 %v876, %v392
      %v995 = vmul.f32 %v852, %v390
      %v996 = vmul.f32 %v853, %v394
      %v997 = vmul.f32 %v877, %v392
      %1022 = vrot.lane.b32.xlu0 %v838, 127
      %v1023 = vpop.permute.xlu0 %1022
      %1024 = vrot.lane.b32.xlu0 %v839, 127
      %v1025 = vpop.permute.xlu0 %1024
      %1026 = vrot.lane.b32.xlu0 %v870, 127
      %v1027 = vpop.permute.xlu0 %1026
      %1028 = vrot.lane.b32.xlu0 %v840, 127
      %v1029 = vpop.permute.xlu0 %1028
      %1030 = vrot.lane.b32.xlu0 %v841, 127
      %v1031 = vpop.permute.xlu0 %1030
      %1032 = vrot.lane.b32.xlu0 %v871, 127
      %v1033 = vpop.permute.xlu0 %1032
      %1034 = vrot.lane.b32.xlu0 %v842, 127
      %v1035 = vpop.permute.xlu0 %1034
      %1036 = vrot.lane.b32.xlu0 %v843, 127
      %v1037 = vpop.permute.xlu0 %1036
      %1038 = vrot.lane.b32.xlu0 %v872, 127
      %v1039 = vpop.permute.xlu0 %1038
      %1040 = vrot.lane.b32.xlu0 %v844, 127
      %v1041 = vpop.permute.xlu0 %1040
      %1042 = vrot.lane.b32.xlu0 %v845, 127
      %v1043 = vpop.permute.xlu0 %1042
      %1044 = vrot.lane.b32.xlu0 %v873, 127
      %v1045 = vpop.permute.xlu0 %1044
      %1046 = vrot.lane.b32.xlu0 %v846, 127
      %v1047 = vpop.permute.xlu0 %1046
      %1048 = vrot.lane.b32.xlu0 %v847, 127
      %v1049 = vpop.permute.xlu0 %1048
      %1050 = vrot.lane.b32.xlu0 %v874, 127
      %v1051 = vpop.permute.xlu0 %1050
      %1052 = vrot.lane.b32.xlu0 %v848, 127
      %v1053 = vpop.permute.xlu0 %1052
      %1054 = vrot.lane.b32.xlu0 %v849, 127
      %v1055 = vpop.permute.xlu0 %1054
      %1056 = vrot.lane.b32.xlu0 %v875, 127
      %v1057 = vpop.permute.xlu0 %1056
      %1058 = vrot.lane.b32.xlu0 %v850, 127
      %v1059 = vpop.permute.xlu0 %1058
      %1060 = vrot.lane.b32.xlu0 %v851, 127
      %v1061 = vpop.permute.xlu0 %1060
      %1062 = vrot.lane.b32.xlu0 %v876, 127
      %v1063 = vpop.permute.xlu0 %1062
      %1064 = vrot.lane.b32.xlu0 %v852, 127
      %v1065 = vpop.permute.xlu0 %1064
      %1066 = vrot.lane.b32.xlu0 %v853, 127
      %v1067 = vpop.permute.xlu0 %1066
      %1068 = vrot.lane.b32.xlu0 %v877, 127
      %v1069 = vpop.permute.xlu0 %1068
      %v1070 = vsel %vm410, %v1023, %v1025
      %v1071 = vsel %vm410, %v1025, %v1027
      %v1072 = vsel %vm410, %v1029, %v1031
      %v1073 = vsel %vm410, %v1031, %v1033
      %v1074 = vsel %vm410, %v1035, %v1037
      %v1075 = vsel %vm410, %v1037, %v1039
      %v1076 = vsel %vm410, %v1041, %v1043
      %v1077 = vsel %vm410, %v1043, %v1045
      %v1078 = vsel %vm410, %v1047, %v1049
      %v1079 = vsel %vm410, %v1049, %v1051
      %v1080 = vsel %vm410, %v1053, %v1055
      %v1081 = vsel %vm410, %v1055, %v1057
      %v1082 = vsel %vm410, %v1059, %v1061
      %v1083 = vsel %vm410, %v1061, %v1063
      %v1084 = vsel %vm410, %v1065, %v1067
      %v1085 = vsel %vm410, %v1067, %v1069
      %1126 = vrot.lane.b32.xlu0 %v878, 126
      %v1127 = vpop.permute.xlu0 %1126
      %1128 = vrot.lane.b32.xlu0 %v879, 126
      %v1129 = vpop.permute.xlu0 %1128
      %1130 = vrot.lane.b32.xlu0 %v880, 126
      %v1131 = vpop.permute.xlu0 %1130
      %1132 = vrot.lane.b32.xlu0 %v881, 126
      %v1133 = vpop.permute.xlu0 %1132
      %1134 = vrot.lane.b32.xlu0 %v882, 126
      %v1135 = vpop.permute.xlu0 %1134
      %1136 = vrot.lane.b32.xlu0 %v883, 126
      %v1137 = vpop.permute.xlu0 %1136
      %1138 = vrot.lane.b32.xlu0 %v884, 126
      %v1139 = vpop.permute.xlu0 %1138
      %1140 = vrot.lane.b32.xlu0 %v885, 126
      %v1141 = vpop.permute.xlu0 %1140
      %1142 = vrot.lane.b32.xlu0 %v886, 126
      %v1143 = vpop.permute.xlu0 %1142
      %1144 = vrot.lane.b32.xlu0 %v887, 126
      %v1145 = vpop.permute.xlu0 %1144
      %1146 = vrot.lane.b32.xlu0 %v888, 126
      %v1147 = vpop.permute.xlu0 %1146
      %1148 = vrot.lane.b32.xlu0 %v889, 126
      %v1149 = vpop.permute.xlu0 %1148
      %1150 = vrot.lane.b32.xlu0 %v890, 126
      %v1151 = vpop.permute.xlu0 %1150
      %1152 = vrot.lane.b32.xlu0 %v891, 126
      %v1153 = vpop.permute.xlu0 %1152
      %1154 = vrot.lane.b32.xlu0 %v892, 126
      %v1155 = vpop.permute.xlu0 %1154
      %1156 = vrot.lane.b32.xlu0 %v893, 126
      %v1157 = vpop.permute.xlu0 %1156
      %1158 = vrot.lane.b32.xlu0 %v894, 126
      %v1159 = vpop.permute.xlu0 %1158
      %1160 = vrot.lane.b32.xlu0 %v895, 126
      %v1161 = vpop.permute.xlu0 %1160
      %1162 = vrot.lane.b32.xlu0 %v896, 126
      %v1163 = vpop.permute.xlu0 %1162
      %1164 = vrot.lane.b32.xlu0 %v897, 126
      %v1165 = vpop.permute.xlu0 %1164
      %1166 = vrot.lane.b32.xlu0 %v898, 126
      %v1167 = vpop.permute.xlu0 %1166
      %1168 = vrot.lane.b32.xlu0 %v899, 126
      %v1169 = vpop.permute.xlu0 %1168
      %1170 = vrot.lane.b32.xlu0 %v900, 126
      %v1171 = vpop.permute.xlu0 %1170
      %1172 = vrot.lane.b32.xlu0 %v901, 126
      %v1173 = vpop.permute.xlu0 %1172
      %v1174 = vsel %vm424, %v1127, %v1129
      %v1175 = vsel %vm424, %v1129, %v1131
      %v1176 = vsel %vm424, %v1133, %v1135
      %v1177 = vsel %vm424, %v1135, %v1137
      %v1178 = vsel %vm424, %v1139, %v1141
      %v1179 = vsel %vm424, %v1141, %v1143
      %v1180 = vsel %vm424, %v1145, %v1147
      %v1181 = vsel %vm424, %v1147, %v1149
      %v1182 = vsel %vm424, %v1151, %v1153
      %v1183 = vsel %vm424, %v1153, %v1155
      %v1184 = vsel %vm424, %v1157, %v1159
      %v1185 = vsel %vm424, %v1159, %v1161
      %v1186 = vsel %vm424, %v1163, %v1165
      %v1187 = vsel %vm424, %v1165, %v1167
      %v1188 = vsel %vm424, %v1169, %v1171
      %v1189 = vsel %vm424, %v1171, %v1173
      %1230 = vrot.lane.b32.xlu0 %v902, 112
      %v1231 = vpop.permute.xlu0 %1230
      %1232 = vrot.lane.b32.xlu0 %v903, 112
      %v1233 = vpop.permute.xlu0 %1232
      %1234 = vrot.lane.b32.xlu0 %v904, 112
      %v1235 = vpop.permute.xlu0 %1234
      %1236 = vrot.lane.b32.xlu0 %v905, 112
      %v1237 = vpop.permute.xlu0 %1236
      %1238 = vrot.lane.b32.xlu0 %v906, 112
      %v1239 = vpop.permute.xlu0 %1238
      %1240 = vrot.lane.b32.xlu0 %v907, 112
      %v1241 = vpop.permute.xlu0 %1240
      %1242 = vrot.lane.b32.xlu0 %v908, 112
      %v1243 = vpop.permute.xlu0 %1242
      %1244 = vrot.lane.b32.xlu0 %v909, 112
      %v1245 = vpop.permute.xlu0 %1244
      %1246 = vrot.lane.b32.xlu0 %v910, 112
      %v1247 = vpop.permute.xlu0 %1246
      %1248 = vrot.lane.b32.xlu0 %v911, 112
      %v1249 = vpop.permute.xlu0 %1248
      %1250 = vrot.lane.b32.xlu0 %v912, 112
      %v1251 = vpop.permute.xlu0 %1250
      %1252 = vrot.lane.b32.xlu0 %v913, 112
      %v1253 = vpop.permute.xlu0 %1252
      %1254 = vrot.lane.b32.xlu0 %v914, 112
      %v1255 = vpop.permute.xlu0 %1254
      %1256 = vrot.lane.b32.xlu0 %v915, 112
      %v1257 = vpop.permute.xlu0 %1256
      %1258 = vrot.lane.b32.xlu0 %v916, 112
      %v1259 = vpop.permute.xlu0 %1258
      %1260 = vrot.lane.b32.xlu0 %v917, 112
      %v1261 = vpop.permute.xlu0 %1260
      %1262 = vrot.lane.b32.xlu0 %v918, 112
      %v1263 = vpop.permute.xlu0 %1262
      %1264 = vrot.lane.b32.xlu0 %v919, 112
      %v1265 = vpop.permute.xlu0 %1264
      %1266 = vrot.lane.b32.xlu0 %v920, 112
      %v1267 = vpop.permute.xlu0 %1266
      %1268 = vrot.lane.b32.xlu0 %v921, 112
      %v1269 = vpop.permute.xlu0 %1268
      %1270 = vrot.lane.b32.xlu0 %v922, 112
      %v1271 = vpop.permute.xlu0 %1270
      %1272 = vrot.lane.b32.xlu0 %v923, 112
      %v1273 = vpop.permute.xlu0 %1272
      %1274 = vrot.lane.b32.xlu0 %v924, 112
      %v1275 = vpop.permute.xlu0 %1274
      %1276 = vrot.lane.b32.xlu0 %v925, 112
      %v1277 = vpop.permute.xlu0 %1276
      %v1278 = vsel %vm438, %v1231, %v1233
      %v1279 = vsel %vm438, %v1233, %v1235
      %v1280 = vsel %vm438, %v1237, %v1239
      %v1281 = vsel %vm438, %v1239, %v1241
      %v1282 = vsel %vm438, %v1243, %v1245
      %v1283 = vsel %vm438, %v1245, %v1247
      %v1284 = vsel %vm438, %v1249, %v1251
      %v1285 = vsel %vm438, %v1251, %v1253
      %v1286 = vsel %vm438, %v1255, %v1257
      %v1287 = vsel %vm438, %v1257, %v1259
      %v1288 = vsel %vm438, %v1261, %v1263
      %v1289 = vsel %vm438, %v1263, %v1265
      %v1290 = vsel %vm438, %v1267, %v1269
      %v1291 = vsel %vm438, %v1269, %v1271
      %v1292 = vsel %vm438, %v1273, %v1275
      %v1293 = vsel %vm438, %v1275, %v1277
      %1310 = vrot.lane.b32.xlu0 %v838, 111
      %v1311 = vpop.permute.xlu0 %1310
      %1312 = vrot.lane.b32.xlu0 %v839, 111
      %v1313 = vpop.permute.xlu0 %1312
      %1314 = vrot.lane.b32.xlu0 %v870, 111
      %v1315 = vpop.permute.xlu0 %1314
      %1316 = vrot.lane.b32.xlu0 %v840, 111
      %v1317 = vpop.permute.xlu0 %1316
      %1318 = vrot.lane.b32.xlu0 %v841, 111
      %v1319 = vpop.permute.xlu0 %1318
      %1320 = vrot.lane.b32.xlu0 %v871, 111
      %v1321 = vpop.permute.xlu0 %1320
      %1322 = vrot.lane.b32.xlu0 %v842, 111
      %v1323 = vpop.permute.xlu0 %1322
      %1324 = vrot.lane.b32.xlu0 %v843, 111
      %v1325 = vpop.permute.xlu0 %1324
      %1326 = vrot.lane.b32.xlu0 %v872, 111
      %v1327 = vpop.permute.xlu0 %1326
      %1328 = vrot.lane.b32.xlu0 %v844, 111
      %v1329 = vpop.permute.xlu0 %1328
      %1330 = vrot.lane.b32.xlu0 %v845, 111
      %v1331 = vpop.permute.xlu0 %1330
      %1332 = vrot.lane.b32.xlu0 %v873, 111
      %v1333 = vpop.permute.xlu0 %1332
      %1334 = vrot.lane.b32.xlu0 %v846, 111
      %v1335 = vpop.permute.xlu0 %1334
      %1336 = vrot.lane.b32.xlu0 %v847, 111
      %v1337 = vpop.permute.xlu0 %1336
      %1338 = vrot.lane.b32.xlu0 %v874, 111
      %v1339 = vpop.permute.xlu0 %1338
      %1340 = vrot.lane.b32.xlu0 %v848, 111
      %v1341 = vpop.permute.xlu0 %1340
      %1342 = vrot.lane.b32.xlu0 %v849, 111
      %v1343 = vpop.permute.xlu0 %1342
      %1344 = vrot.lane.b32.xlu0 %v875, 111
      %v1345 = vpop.permute.xlu0 %1344
      %1346 = vrot.lane.b32.xlu0 %v850, 111
      %v1347 = vpop.permute.xlu0 %1346
      %1348 = vrot.lane.b32.xlu0 %v851, 111
      %v1349 = vpop.permute.xlu0 %1348
      %1350 = vrot.lane.b32.xlu0 %v876, 111
      %v1351 = vpop.permute.xlu0 %1350
      %1352 = vrot.lane.b32.xlu0 %v852, 111
      %v1353 = vpop.permute.xlu0 %1352
      %1354 = vrot.lane.b32.xlu0 %v853, 111
      %v1355 = vpop.permute.xlu0 %1354
      %1356 = vrot.lane.b32.xlu0 %v877, 111
      %v1357 = vpop.permute.xlu0 %1356
      %v1358 = vsel %vm449, %v1311, %v1313
      %v1359 = vsel %vm449, %v1313, %v1315
      %v1360 = vsel %vm449, %v1317, %v1319
      %v1361 = vsel %vm449, %v1319, %v1321
      %v1362 = vsel %vm449, %v1323, %v1325
      %v1363 = vsel %vm449, %v1325, %v1327
      %v1364 = vsel %vm449, %v1329, %v1331
      %v1365 = vsel %vm449, %v1331, %v1333
      %v1366 = vsel %vm449, %v1335, %v1337
      %v1367 = vsel %vm449, %v1337, %v1339
      %v1368 = vsel %vm449, %v1341, %v1343
      %v1369 = vsel %vm449, %v1343, %v1345
      %v1370 = vsel %vm449, %v1347, %v1349
      %v1371 = vsel %vm449, %v1349, %v1351
      %v1372 = vsel %vm449, %v1353, %v1355
      %v1373 = vsel %vm449, %v1355, %v1357
      %1414 = vrot.lane.b32.xlu0 %v926, 110
      %v1415 = vpop.permute.xlu0 %1414
      %1416 = vrot.lane.b32.xlu0 %v927, 110
      %v1417 = vpop.permute.xlu0 %1416
      %1418 = vrot.lane.b32.xlu0 %v928, 110
      %v1419 = vpop.permute.xlu0 %1418
      %1420 = vrot.lane.b32.xlu0 %v929, 110
      %v1421 = vpop.permute.xlu0 %1420
      %1422 = vrot.lane.b32.xlu0 %v930, 110
      %v1423 = vpop.permute.xlu0 %1422
      %1424 = vrot.lane.b32.xlu0 %v931, 110
      %v1425 = vpop.permute.xlu0 %1424
      %1426 = vrot.lane.b32.xlu0 %v932, 110
      %v1427 = vpop.permute.xlu0 %1426
      %1428 = vrot.lane.b32.xlu0 %v933, 110
      %v1429 = vpop.permute.xlu0 %1428
      %1430 = vrot.lane.b32.xlu0 %v934, 110
      %v1431 = vpop.permute.xlu0 %1430
      %1432 = vrot.lane.b32.xlu0 %v935, 110
      %v1433 = vpop.permute.xlu0 %1432
      %1434 = vrot.lane.b32.xlu0 %v936, 110
      %v1435 = vpop.permute.xlu0 %1434
      %1436 = vrot.lane.b32.xlu0 %v937, 110
      %v1437 = vpop.permute.xlu0 %1436
      %1438 = vrot.lane.b32.xlu0 %v938, 110
      %v1439 = vpop.permute.xlu0 %1438
      %1440 = vrot.lane.b32.xlu0 %v939, 110
      %v1441 = vpop.permute.xlu0 %1440
      %1442 = vrot.lane.b32.xlu0 %v940, 110
      %v1443 = vpop.permute.xlu0 %1442
      %1444 = vrot.lane.b32.xlu0 %v941, 110
      %v1445 = vpop.permute.xlu0 %1444
      %1446 = vrot.lane.b32.xlu0 %v942, 110
      %v1447 = vpop.permute.xlu0 %1446
      %1448 = vrot.lane.b32.xlu0 %v943, 110
      %v1449 = vpop.permute.xlu0 %1448
      %1450 = vrot.lane.b32.xlu0 %v944, 110
      %v1451 = vpop.permute.xlu0 %1450
      %1452 = vrot.lane.b32.xlu0 %v945, 110
      %v1453 = vpop.permute.xlu0 %1452
      %1454 = vrot.lane.b32.xlu0 %v946, 110
      %v1455 = vpop.permute.xlu0 %1454
      %1456 = vrot.lane.b32.xlu0 %v947, 110
      %v1457 = vpop.permute.xlu0 %1456
      %1458 = vrot.lane.b32.xlu0 %v948, 110
      %v1459 = vpop.permute.xlu0 %1458
      %1460 = vrot.lane.b32.xlu0 %v949, 110
      %v1461 = vpop.permute.xlu0 %1460
      %v1462 = vsel %vm463, %v1415, %v1417
      %v1463 = vsel %vm463, %v1417, %v1419
      %v1464 = vsel %vm463, %v1421, %v1423
      %v1465 = vsel %vm463, %v1423, %v1425
      %v1466 = vsel %vm463, %v1427, %v1429
      %v1467 = vsel %vm463, %v1429, %v1431
      %v1468 = vsel %vm463, %v1433, %v1435
      %v1469 = vsel %vm463, %v1435, %v1437
      %v1470 = vsel %vm463, %v1439, %v1441
      %v1471 = vsel %vm463, %v1441, %v1443
      %v1472 = vsel %vm463, %v1445, %v1447
      %v1473 = vsel %vm463, %v1447, %v1449
      %v1474 = vsel %vm463, %v1451, %v1453
      %v1475 = vsel %vm463, %v1453, %v1455
      %v1476 = vsel %vm463, %v1457, %v1459
      %v1477 = vsel %vm463, %v1459, %v1461
      %1518 = vrot.lane.b32.xlu0 %v950, 96
      %v1519 = vpop.permute.xlu0 %1518
      %1520 = vrot.lane.b32.xlu0 %v951, 96
      %v1521 = vpop.permute.xlu0 %1520
      %1522 = vrot.lane.b32.xlu0 %v952, 96
      %v1523 = vpop.permute.xlu0 %1522
      %1524 = vrot.lane.b32.xlu0 %v953, 96
      %v1525 = vpop.permute.xlu0 %1524
      %1526 = vrot.lane.b32.xlu0 %v954, 96
      %v1527 = vpop.permute.xlu0 %1526
      %1528 = vrot.lane.b32.xlu0 %v955, 96
      %v1529 = vpop.permute.xlu0 %1528
      %1530 = vrot.lane.b32.xlu0 %v956, 96
      %v1531 = vpop.permute.xlu0 %1530
      %1532 = vrot.lane.b32.xlu0 %v957, 96
      %v1533 = vpop.permute.xlu0 %1532
      %1534 = vrot.lane.b32.xlu0 %v958, 96
      %v1535 = vpop.permute.xlu0 %1534
      %1536 = vrot.lane.b32.xlu0 %v959, 96
      %v1537 = vpop.permute.xlu0 %1536
      %1538 = vrot.lane.b32.xlu0 %v960, 96
      %v1539 = vpop.permute.xlu0 %1538
      %1540 = vrot.lane.b32.xlu0 %v961, 96
      %v1541 = vpop.permute.xlu0 %1540
      %1542 = vrot.lane.b32.xlu0 %v962, 96
      %v1543 = vpop.permute.xlu0 %1542
      %1544 = vrot.lane.b32.xlu0 %v963, 96
      %v1545 = vpop.permute.xlu0 %1544
      %1546 = vrot.lane.b32.xlu0 %v964, 96
      %v1547 = vpop.permute.xlu0 %1546
      %1548 = vrot.lane.b32.xlu0 %v965, 96
      %v1549 = vpop.permute.xlu0 %1548
      %1550 = vrot.lane.b32.xlu0 %v966, 96
      %v1551 = vpop.permute.xlu0 %1550
      %1552 = vrot.lane.b32.xlu0 %v967, 96
      %v1553 = vpop.permute.xlu0 %1552
      %1554 = vrot.lane.b32.xlu0 %v968, 96
      %v1555 = vpop.permute.xlu0 %1554
      %1556 = vrot.lane.b32.xlu0 %v969, 96
      %v1557 = vpop.permute.xlu0 %1556
      %1558 = vrot.lane.b32.xlu0 %v970, 96
      %v1559 = vpop.permute.xlu0 %1558
      %1560 = vrot.lane.b32.xlu0 %v971, 96
      %v1561 = vpop.permute.xlu0 %1560
      %1562 = vrot.lane.b32.xlu0 %v972, 96
      %v1563 = vpop.permute.xlu0 %1562
      %1564 = vrot.lane.b32.xlu0 %v973, 96
      %v1565 = vpop.permute.xlu0 %1564
      %v1566 = vsel %vm477, %v1519, %v1521
      %v1567 = vsel %vm477, %v1521, %v1523
      %v1568 = vsel %vm477, %v1525, %v1527
      %v1569 = vsel %vm477, %v1527, %v1529
      %v1570 = vsel %vm477, %v1531, %v1533
      %v1571 = vsel %vm477, %v1533, %v1535
      %v1572 = vsel %vm477, %v1537, %v1539
      %v1573 = vsel %vm477, %v1539, %v1541
      %v1574 = vsel %vm477, %v1543, %v1545
      %v1575 = vsel %vm477, %v1545, %v1547
      %v1576 = vsel %vm477, %v1549, %v1551
      %v1577 = vsel %vm477, %v1551, %v1553
      %v1578 = vsel %vm477, %v1555, %v1557
      %v1579 = vsel %vm477, %v1557, %v1559
      %v1580 = vsel %vm477, %v1561, %v1563
      %v1581 = vsel %vm477, %v1563, %v1565
      %1598 = vrot.lane.b32.xlu0 %v838, 95
      %v1599 = vpop.permute.xlu0 %1598
      %1600 = vrot.lane.b32.xlu0 %v839, 95
      %v1601 = vpop.permute.xlu0 %1600
      %1602 = vrot.lane.b32.xlu0 %v870, 95
      %v1603 = vpop.permute.xlu0 %1602
      %1604 = vrot.lane.b32.xlu0 %v840, 95
      %v1605 = vpop.permute.xlu0 %1604
      %1606 = vrot.lane.b32.xlu0 %v841, 95
      %v1607 = vpop.permute.xlu0 %1606
      %1608 = vrot.lane.b32.xlu0 %v871, 95
      %v1609 = vpop.permute.xlu0 %1608
      %1610 = vrot.lane.b32.xlu0 %v842, 95
      %v1611 = vpop.permute.xlu0 %1610
      %1612 = vrot.lane.b32.xlu0 %v843, 95
      %v1613 = vpop.permute.xlu0 %1612
      %1614 = vrot.lane.b32.xlu0 %v872, 95
      %v1615 = vpop.permute.xlu0 %1614
      %1616 = vrot.lane.b32.xlu0 %v844, 95
      %v1617 = vpop.permute.xlu0 %1616
      %1618 = vrot.lane.b32.xlu0 %v845, 95
      %v1619 = vpop.permute.xlu0 %1618
      %1620 = vrot.lane.b32.xlu0 %v873, 95
      %v1621 = vpop.permute.xlu0 %1620
      %1622 = vrot.lane.b32.xlu0 %v846, 95
      %v1623 = vpop.permute.xlu0 %1622
      %1624 = vrot.lane.b32.xlu0 %v847, 95
      %v1625 = vpop.permute.xlu0 %1624
      %1626 = vrot.lane.b32.xlu0 %v874, 95
      %v1627 = vpop.permute.xlu0 %1626
      %1628 = vrot.lane.b32.xlu0 %v848, 95
      %v1629 = vpop.permute.xlu0 %1628
      %1630 = vrot.lane.b32.xlu0 %v849, 95
      %v1631 = vpop.permute.xlu0 %1630
      %1632 = vrot.lane.b32.xlu0 %v875, 95
      %v1633 = vpop.permute.xlu0 %1632
      %1634 = vrot.lane.b32.xlu0 %v850, 95
      %v1635 = vpop.permute.xlu0 %1634
      %1636 = vrot.lane.b32.xlu0 %v851, 95
      %v1637 = vpop.permute.xlu0 %1636
      %1638 = vrot.lane.b32.xlu0 %v876, 95
      %v1639 = vpop.permute.xlu0 %1638
      %1640 = vrot.lane.b32.xlu0 %v852, 95
      %v1641 = vpop.permute.xlu0 %1640
      %1642 = vrot.lane.b32.xlu0 %v853, 95
      %v1643 = vpop.permute.xlu0 %1642
      %1644 = vrot.lane.b32.xlu0 %v877, 95
      %v1645 = vpop.permute.xlu0 %1644
      %v1646 = vsel %vm488, %v1599, %v1601
      %v1647 = vsel %vm488, %v1601, %v1603
      %v1648 = vsel %vm488, %v1605, %v1607
      %v1649 = vsel %vm488, %v1607, %v1609
      %v1650 = vsel %vm488, %v1611, %v1613
      %v1651 = vsel %vm488, %v1613, %v1615
      %v1652 = vsel %vm488, %v1617, %v1619
      %v1653 = vsel %vm488, %v1619, %v1621
      %v1654 = vsel %vm488, %v1623, %v1625
      %v1655 = vsel %vm488, %v1625, %v1627
      %v1656 = vsel %vm488, %v1629, %v1631
      %v1657 = vsel %vm488, %v1631, %v1633
      %v1658 = vsel %vm488, %v1635, %v1637
      %v1659 = vsel %vm488, %v1637, %v1639
      %v1660 = vsel %vm488, %v1641, %v1643
      %v1661 = vsel %vm488, %v1643, %v1645
      %1702 = vrot.lane.b32.xlu0 %v974, 94
      %v1703 = vpop.permute.xlu0 %1702
      %1704 = vrot.lane.b32.xlu0 %v975, 94
      %v1705 = vpop.permute.xlu0 %1704
      %1706 = vrot.lane.b32.xlu0 %v976, 94
      %v1707 = vpop.permute.xlu0 %1706
      %1708 = vrot.lane.b32.xlu0 %v977, 94
      %v1709 = vpop.permute.xlu0 %1708
      %1710 = vrot.lane.b32.xlu0 %v978, 94
      %v1711 = vpop.permute.xlu0 %1710
      %1712 = vrot.lane.b32.xlu0 %v979, 94
      %v1713 = vpop.permute.xlu0 %1712
      %1714 = vrot.lane.b32.xlu0 %v980, 94
      %v1715 = vpop.permute.xlu0 %1714
      %1716 = vrot.lane.b32.xlu0 %v981, 94
      %v1717 = vpop.permute.xlu0 %1716
      %1718 = vrot.lane.b32.xlu0 %v982, 94
      %v1719 = vpop.permute.xlu0 %1718
      %1720 = vrot.lane.b32.xlu0 %v983, 94
      %v1721 = vpop.permute.xlu0 %1720
      %1722 = vrot.lane.b32.xlu0 %v984, 94
      %v1723 = vpop.permute.xlu0 %1722
      %1724 = vrot.lane.b32.xlu0 %v985, 94
      %v1725 = vpop.permute.xlu0 %1724
      %1726 = vrot.lane.b32.xlu0 %v986, 94
      %v1727 = vpop.permute.xlu0 %1726
      %1728 = vrot.lane.b32.xlu0 %v987, 94
      %v1729 = vpop.permute.xlu0 %1728
      %1730 = vrot.lane.b32.xlu0 %v988, 94
      %v1731 = vpop.permute.xlu0 %1730
      %1732 = vrot.lane.b32.xlu0 %v989, 94
      %v1733 = vpop.permute.xlu0 %1732
      %1734 = vrot.lane.b32.xlu0 %v990, 94
      %v1735 = vpop.permute.xlu0 %1734
      %1736 = vrot.lane.b32.xlu0 %v991, 94
      %v1737 = vpop.permute.xlu0 %1736
      %1738 = vrot.lane.b32.xlu0 %v992, 94
      %v1739 = vpop.permute.xlu0 %1738
      %1740 = vrot.lane.b32.xlu0 %v993, 94
      %v1741 = vpop.permute.xlu0 %1740
      %1742 = vrot.lane.b32.xlu0 %v994, 94
      %v1743 = vpop.permute.xlu0 %1742
      %1744 = vrot.lane.b32.xlu0 %v995, 94
      %v1745 = vpop.permute.xlu0 %1744
      %1746 = vrot.lane.b32.xlu0 %v996, 94
      %v1747 = vpop.permute.xlu0 %1746
      %1748 = vrot.lane.b32.xlu0 %v997, 94
      %v1749 = vpop.permute.xlu0 %1748
      %v1750 = vsel %vm502, %v1703, %v1705
      %v1751 = vsel %vm502, %v1705, %v1707
      %v1752 = vsel %vm502, %v1709, %v1711
      %v1753 = vsel %vm502, %v1711, %v1713
      %v1754 = vsel %vm502, %v1715, %v1717
      %v1755 = vsel %vm502, %v1717, %v1719
      %v1756 = vsel %vm502, %v1721, %v1723
      %v1757 = vsel %vm502, %v1723, %v1725
      %v1758 = vsel %vm502, %v1727, %v1729
      %v1759 = vsel %vm502, %v1729, %v1731
      %v1760 = vsel %vm502, %v1733, %v1735
      %v1761 = vsel %vm502, %v1735, %v1737
      %v1762 = vsel %vm502, %v1739, %v1741
      %v1763 = vsel %vm502, %v1741, %v1743
      %v1764 = vsel %vm502, %v1745, %v1747
      %v1765 = vsel %vm502, %v1747, %v1749
      %v1782 = vpack.c.bf16 %v856, %v854
      %v1783 = vpack.c.bf16 %v857, %v855
      %v1784 = vpack.c.bf16 %v860, %v858
      %v1785 = vpack.c.bf16 %v861, %v859
      %v1786 = vpack.c.bf16 %v864, %v862
      %v1787 = vpack.c.bf16 %v865, %v863
      %v1788 = vpack.c.bf16 %v868, %v866
      %v1789 = vpack.c.bf16 %v869, %v867
      %v1790 = vpack.c.bf16 %v1072, %v1070
      %v1791 = vpack.c.bf16 %v1073, %v1071
      %v1792 = vpack.c.bf16 %v1076, %v1074
      %v1793 = vpack.c.bf16 %v1077, %v1075
      %v1794 = vpack.c.bf16 %v1080, %v1078
      %v1795 = vpack.c.bf16 %v1081, %v1079
      %v1796 = vpack.c.bf16 %v1084, %v1082
      %v1797 = vpack.c.bf16 %v1085, %v1083
      %v1798 = vpack.c.bf16 %v1176, %v1174
      %v1799 = vpack.c.bf16 %v1177, %v1175
      %v1800 = vpack.c.bf16 %v1180, %v1178
      %v1801 = vpack.c.bf16 %v1181, %v1179
      %v1802 = vpack.c.bf16 %v1184, %v1182
      %v1803 = vpack.c.bf16 %v1185, %v1183
      %v1804 = vpack.c.bf16 %v1188, %v1186
      %v1805 = vpack.c.bf16 %v1189, %v1187
      %v1806 = vpack.c.bf16 %v1280, %v1278
      %v1807 = vpack.c.bf16 %v1281, %v1279
      %v1808 = vpack.c.bf16 %v1284, %v1282
      %v1809 = vpack.c.bf16 %v1285, %v1283
      %v1810 = vpack.c.bf16 %v1288, %v1286
      %v1811 = vpack.c.bf16 %v1289, %v1287
      %v1812 = vpack.c.bf16 %v1292, %v1290
      %v1813 = vpack.c.bf16 %v1293, %v1291
      %v1814 = vpack.c.bf16 %v1360, %v1358
      %v1815 = vpack.c.bf16 %v1361, %v1359
      %v1816 = vpack.c.bf16 %v1364, %v1362
      %v1817 = vpack.c.bf16 %v1365, %v1363
      %v1818 = vpack.c.bf16 %v1368, %v1366
      %v1819 = vpack.c.bf16 %v1369, %v1367
      %v1820 = vpack.c.bf16 %v1372, %v1370
      %v1821 = vpack.c.bf16 %v1373, %v1371
      %v1822 = vpack.c.bf16 %v1464, %v1462
      %v1823 = vpack.c.bf16 %v1465, %v1463
      %v1824 = vpack.c.bf16 %v1468, %v1466
      %v1825 = vpack.c.bf16 %v1469, %v1467
      %v1826 = vpack.c.bf16 %v1472, %v1470
      %v1827 = vpack.c.bf16 %v1473, %v1471
      %v1828 = vpack.c.bf16 %v1476, %v1474
      %v1829 = vpack.c.bf16 %v1477, %v1475
      %v1830 = vpack.c.bf16 %v1568, %v1566
      %v1831 = vpack.c.bf16 %v1569, %v1567
      %v1832 = vpack.c.bf16 %v1572, %v1570
      %v1833 = vpack.c.bf16 %v1573, %v1571
      %v1834 = vpack.c.bf16 %v1576, %v1574
      %v1835 = vpack.c.bf16 %v1577, %v1575
      %v1836 = vpack.c.bf16 %v1580, %v1578
      %v1837 = vpack.c.bf16 %v1581, %v1579
      %v1838 = vpack.c.bf16 %v1648, %v1646
      %v1839 = vpack.c.bf16 %v1649, %v1647
      %v1840 = vpack.c.bf16 %v1652, %v1650
      %v1841 = vpack.c.bf16 %v1653, %v1651
      %v1842 = vpack.c.bf16 %v1656, %v1654
      %v1843 = vpack.c.bf16 %v1657, %v1655
      %v1844 = vpack.c.bf16 %v1660, %v1658
      %v1845 = vpack.c.bf16 %v1661, %v1659
      %v1846 = vpack.c.bf16 %v1752, %v1750
      %v1847 = vpack.c.bf16 %v1753, %v1751
      %v1848 = vpack.c.bf16 %v1756, %v1754
      %v1849 = vpack.c.bf16 %v1757, %v1755
      %v1850 = vpack.c.bf16 %v1760, %v1758
      %v1851 = vpack.c.bf16 %v1761, %v1759
      %v1852 = vpack.c.bf16 %v1764, %v1762
      %v1853 = vpack.c.bf16 %v1765, %v1763
      %v1854 = vld [vmem:[%s3] sm:$0xff]
      %v1855 = vld [vmem:[%s3 + $0x8] sm:$0x3]
      %v1856 = vld [vmem:[%s4] sm:$0x7]
      %1858 = vset.pattern.permute.xlu0 0
      %1859 = vperm.xlu0 %1858, %v1856
      %v1860 = vpop.permute.xlu0 %1859
      %v1864 = vcombine.high %v1854, %v1854
      %v1866 = vunpack.c.l.s4 1983009808
      %v1867 = vunpack.c.0.s8 %v1866
      %v1868 = vlaneseq
      %v1869 = vshrl.u32 %v1868, 7
      %v1870 = vsub.s32 %v1867, %v1869
      %v1871 = vrot.slane %v1854, %v1870
      %v1873 = vunpack.c.l.s4 1983009808
      %v1874 = vunpack.c.0.s8 %v1873
      %v1875 = vlaneseq
      %v1876 = vshrl.u32 %v1875, 7
      %v1877 = vsub.s32 %v1874, %v1876
      %v1878 = vrot.slane %v1864, %v1877
      %v1879 = vcombine.high %v1871, %v1871
      %v1880 = vcombine.high %v1878, %v1878
      %v1882 = vunpack.c.l.s4 1983009808
      %v1883 = vunpack.c.0.s8 %v1882
      %v1884 = vlaneseq
      %v1885 = vshrl.u32 %v1884, 7
      %v1886 = vsub.s32 %v1883, %v1885
      %v1887 = vrot.slane %v1855, %v1886
      %vm1892 = vcmask 523264
      %v1894 = vsel %vm1892, %v1887, 0
      %1896 = vmatprep.subr.bf16.mxu0 %v1783
      %1897 = vmatpush1.bf16.msra.mxu0 %v1782
      %1898 = vmatprep.subr.bf16.mxu0 %v1785
      %1899 = vmatpush1.bf16.msra.mxu0 %v1784
      %1900 = vmatprep.subr.bf16.mxu0 %v1787
      %1901 = vmatpush1.bf16.msra.mxu0 %v1786
      %1902 = vmatprep.subr.bf16.mxu0 %v1789
      %1903 = vmatpush1.bf16.msra.mxu0 %v1788
      %1904 = vmatprep.subr.bf16.mxu0 %v1791
      %1905 = vmatpush1.bf16.msra.mxu0 %v1790
      %1906 = vmatprep.subr.bf16.mxu0 %v1793
      %1907 = vmatpush1.bf16.msra.mxu0 %v1792
      %1908 = vmatprep.subr.bf16.mxu0 %v1795
      %1909 = vmatpush1.bf16.msra.mxu0 %v1794
      %1910 = vmatprep.subr.bf16.mxu0 %v1797
      %1911 = vmatpush1.bf16.msra.mxu0 %v1796
      %1912 = vmatprep.subr.bf16.mxu0 %v1799
      %1913 = vmatpush1.bf16.msra.mxu0 %v1798
      %1914 = vmatprep.subr.bf16.mxu0 %v1801
      %1915 = vmatpush1.bf16.msra.mxu0 %v1800
      %1916 = vmatprep.subr.bf16.mxu0 %v1803
      %1917 = vmatpush1.bf16.msra.mxu0 %v1802
      %1918 = vmatprep.subr.bf16.mxu0 %v1805
      %1919 = vmatpush1.bf16.msra.mxu0 %v1804
      %1920 = vmatprep.subr.bf16.mxu0 %v1807
      %1921 = vmatpush1.bf16.msra.mxu0 %v1806
      %1922 = vmatprep.subr.bf16.mxu0 %v1809
      %1923 = vmatpush1.bf16.msra.mxu0 %v1808
      %1924 = vmatprep.subr.bf16.mxu0 %v1811
      %1925 = vmatpush1.bf16.msra.mxu0 %v1810
      %1926 = vmatprep.subr.bf16.mxu0 %v1813
      %1927 = vmatpush1.bf16.msra.mxu0 %v1812
      %1928 = vmatprep.mubr.bf16.mxu0 %v1879
      %1929 = vmatmul.mubr.bf16.gmra.mrb[0].mxu0 %v1871
      %v1930 = vpop.f32.mrb[0].mxu0
      %v1931 = vadd.f32 %v1860, %v1930
      %v1932 = vpop.f32.mrb[0].mxu0
      %v1933 = vadd.f32 %v1860, %v1932
      %v1934 = vpop.f32.mrb[0].mxu0
      %v1935 = vpop.f32.mrb[0].mxu0
      %1936 = vdwg.mxu0
      %1937 = vmatprep.subr.bf16.mxu0 %v1815
      %1938 = vmatpush1.bf16.msra.mxu0 %v1814
      %1939 = vmatprep.subr.bf16.mxu0 %v1817
      %1940 = vmatpush1.bf16.msra.mxu0 %v1816
      %1941 = vmatprep.subr.bf16.mxu0 %v1819
      %1942 = vmatpush1.bf16.msra.mxu0 %v1818
      %1943 = vmatprep.subr.bf16.mxu0 %v1821
      %1944 = vmatpush1.bf16.msra.mxu0 %v1820
      %1945 = vmatprep.subr.bf16.mxu0 %v1823
      %1946 = vmatpush1.bf16.msra.mxu0 %v1822
      %1947 = vmatprep.subr.bf16.mxu0 %v1825
      %1948 = vmatpush1.bf16.msra.mxu0 %v1824
      %1949 = vmatprep.subr.bf16.mxu0 %v1827
      %1950 = vmatpush1.bf16.msra.mxu0 %v1826
      %1951 = vmatprep.subr.bf16.mxu0 %v1829
      %1952 = vmatpush1.bf16.msra.mxu0 %v1828
      %1953 = vmatprep.subr.bf16.mxu0 %v1831
      %1954 = vmatpush1.bf16.msra.mxu0 %v1830
      %1955 = vmatprep.subr.bf16.mxu0 %v1833
      %1956 = vmatpush1.bf16.msra.mxu0 %v1832
      %1957 = vmatprep.subr.bf16.mxu0 %v1835
      %1958 = vmatpush1.bf16.msra.mxu0 %v1834
      %1959 = vmatprep.subr.bf16.mxu0 %v1837
      %1960 = vmatpush1.bf16.msra.mxu0 %v1836
      %1961 = vmatprep.subr.bf16.mxu0 %v1839
      %1962 = vmatpush1.bf16.msra.mxu0 %v1838
      %1963 = vmatprep.subr.bf16.mxu0 %v1841
      %1964 = vmatpush1.bf16.msra.mxu0 %v1840
      %1965 = vmatprep.subr.bf16.mxu0 %v1843
      %1966 = vmatpush1.bf16.msra.mxu0 %v1842
      %1967 = vmatprep.subr.bf16.mxu0 %v1845
      %1968 = vmatpush1.bf16.msra.mxu0 %v1844
      %1969 = vmatprep.mubr.bf16.mxu0 %v1880
      %1970 = vmatmul.mubr.bf16.gmra.mrb[0].mxu0 %v1878
      %v1971 = vpop.f32.mrb[0].mxu0
      %v1972 = vadd.f32 %v1931, %v1971
      %v1973 = vpop.f32.mrb[0].mxu0
      %v1974 = vadd.f32 %v1933, %v1973
      %v1975 = vpop.f32.mrb[0].mxu0
      %v1976 = vpop.f32.mrb[0].mxu0
      %1977 = vdwg.mxu0
      %1978 = vmatprep.subr.bf16.mxu0 %v1847
      %1979 = vmatpush1.bf16.msra.mxu0 %v1846
      %1980 = vmatprep.subr.bf16.mxu0 %v1849
      %1981 = vmatpush1.bf16.msra.mxu0 %v1848
      %1982 = vmatprep.subr.bf16.mxu0 %v1851
      %1983 = vmatpush1.bf16.msra.mxu0 %v1850
      %1984 = vmatprep.subr.bf16.mxu0 %v1853
      %1985 = vmatpush1.bf16.msra.mxu0 %v1852
      %1986 = vmatprep.subr.bf16.mxu0 0
      %1987 = vmatpush1.bf16.msra.mxu0 0
      %1988 = vmatprep.subr.bf16.mxu0 0
      %1989 = vmatpush1.bf16.msra.mxu0 0
      %1990 = vmatprep.subr.bf16.mxu0 0
      %1991 = vmatpush1.bf16.msra.mxu0 0
      %1992 = vmatprep.subr.bf16.mxu0 0
      %1993 = vmatpush1.bf16.msra.mxu0 0
      %1994 = vmatprep.subr.bf16.mxu0 0
      %1995 = vmatpush1.bf16.msra.mxu0 0
      %1996 = vmatprep.subr.bf16.mxu0 0
      %1997 = vmatpush1.bf16.msra.mxu0 0
      %1998 = vmatprep.subr.bf16.mxu0 0
      %1999 = vmatpush1.bf16.msra.mxu0 0
      %2000 = vmatprep.subr.bf16.mxu0 0
      %2001 = vmatpush1.bf16.msra.mxu0 0
      %2002 = vmatprep.subr.bf16.mxu0 0
      %2003 = vmatpush1.bf16.msra.mxu0 0
      %2004 = vmatprep.subr.bf16.mxu0 0
      %2005 = vmatpush1.bf16.msra.mxu0 0
      %2006 = vmatprep.subr.bf16.mxu0 0
      %2007 = vmatpush1.bf16.msra.mxu0 0
      %2008 = vmatprep.subr.bf16.mxu0 0
      %2009 = vmatpush1.bf16.msra.mxu0 0
      %2010 = vmatprep.mubr.bf16.mxu0 0
      %2011 = vmatmul.mubr.bf16.gmra.mrb[0].mxu0 %v1894
      %v2012 = vpop.f32.mrb[0].mxu0
      %v2013 = vadd.f32 %v1972, %v2012
      %v2014 = vpop.f32.mrb[0].mxu0
      %v2015 = vadd.f32 %v1974, %v2014
      %v2016 = vpop.f32.mrb[0].mxu0
      %v2017 = vpop.f32.mrb[0].mxu0
      %2018 = vdwg.mxu0
      %v2021 = vcombine.low %v2013, %v2015
      %2023 = vst [vmem:[%s278] sm:$0x77] %v2021
      %p2024 = scmp.lt.s32.totalorder %s18, 1
      %s2025 = scalar_select %p2024, %s18, 1
      %s2026 = smul.addr %s2025, 2
      %s2027 = smul.addr %s2026, 4
      %s2028 = scalar_lea.vmem %s7, %s2027
      // Predicated region
      $region49: #{tpu_custom_call.1} parent=47 // pred_check
        %p2029 = pneg %p188
      $region50: #{tpu_custom_call.1} parent=47 // pred_check_branch
        %2031 = sbr.rel (%p2029) target = $region52
      $region51: #{tpu_custom_call.1} parent=47 // pred_region
        _
      $region52: #{tpu_custom_call.1} parent=47 // pred_fallthru
        _
    $region48: #{tpu_custom_call.1} parent=5 // pred_fallthru
      _
    %p2032 = scmp.le.s32.totalorder 2, %s13
    // Predicated region
    $region53: #{tpu_custom_call.1} parent=5 // pred_check
      %p2033 = pneg %p2032
    $region54: #{tpu_custom_call.1} parent=5 // pred_check_branch
      %2035 = sbr.rel (%p2033) target = $region56
    $region55: #{tpu_custom_call.1} parent=5 // pred_region
      %s2036 = ssub.s32 %s13, 2
      // Predicated region
      $region57: #{tpu_custom_call.1} parent=55 // pred_check
        %p2037 = pneg %p194
      $region58: #{tpu_custom_call.1} parent=55 // pred_check_branch
        %2039 = sbr.rel (%p2037) target = $region60
      $region59: #{tpu_custom_call.1} parent=55 // pred_region
        %p2040 = scmp.lt.s32.totalorder %s19, 1
        %s2041 = scalar_select %p2040, %s19, 1
        %s2042 = smul.addr %s2041, 2
        %s2043 = smul.addr %s2042, 4
        %s2044 = scalar_lea.vmem %s7, %s2043
      $region60: #{tpu_custom_call.1} parent=55 // pred_fallthru
        _
    $region56: #{tpu_custom_call.1} parent=5 // pred_fallthru
      _
  $region6: #{tpu_custom_call.1} parent=0 // loop_footer
    %s17 = sadd.s32 1, %s13
  $region7: #{tpu_custom_call.1} parent=0 // loop_footer_branch
    %12 = sbr.rel target = $region3
  $region8: #{tpu_custom_call.1} parent=0 // loop_exit
    _

</llo_original>
